<compile_context>
chip_gen: v6e
topology: v6e:2x2x1
jax: 0.10.0
libtpu: 0.0.40
codegen_flags: <defaults>
</compile_context>

<pallas_src>
import math

import jax
import jax.numpy as jnp
from jax import lax
from jax.experimental import pallas as pl
from jax.experimental.pallas import tpu as pltpu


def _embedding_kernel(ids_ref,      # SMEM (B, S) int32   [scalar prefetch]
                      tt_ref,       # VMEM (1, TS, 1) f32  token-type coefficient
                      wtab_ref,     # HBM  (V, H)          word table, native dtype
                      ttab_ref,     # VMEM (2, H) f32      token-type table
                      pe_ref,       # VMEM (S, H) f32      resident positional enc
                      gamma_ref,    # VMEM (1, H) f32
                      beta_ref,     # VMEM (1, H) f32
                      out_ref,      # VMEM (1, TS, H) f32
                      word_buf,     # VMEM scratch (2, TS, H), native table dtype
                      sem):         # DMA semaphores (2,)
    b = pl.program_id(0)
    st = pl.program_id(1)
    n_st = pl.num_programs(1)
    _, TS, H = word_buf.shape
    V = wtab_ref.shape[0]
    sqrt_h = jnp.float32(math.sqrt(H))
    slot = lax.rem(st, 2)

    # Largest unroll that divides the tile: keeps the scalar/vector-misc
    # descriptor-issue slots pipelined instead of one DMA start per loop step.
    unroll = next(u for u in (8, 4, 2, 1) if TS % u == 0)

    def issue_tile(tile_idx, slot_idx):
        """Start one HBM->VMEM row DMA per token of `tile_idx` into `slot_idx`."""
        base = tile_idx * TS
        buf = word_buf.at[slot_idx]
        dsem = sem.at[slot_idx]

        @pl.loop(0, TS // unroll)
        def _issue(k):
            i0 = pl.multiple_of(k * unroll, unroll)
            for j in range(unroll):                 # static unroll
                i = i0 + j
                row = jnp.clip(ids_ref[b, base + i], 0, V - 1)
                pltpu.make_async_copy(wtab_ref.at[pl.ds(row, 1), :],
                                      buf.at[pl.ds(i, 1), :],
                                      dsem).start()

    # Prime this batch row's first tile.  Every megacore partition of the
    # (parallel) batch axis sees st == 0 for each batch element it owns.
    @pl.when(st == 0)
    def _():
        issue_tile(0, 0)

    # Prefetch the next sequence tile of the same batch element into the other
    # slot so its gather latency overlaps this tile's LayerNorm.
    @pl.when(st + 1 < n_st)
    def _():
        issue_tile(st + 1, 1 - slot)

    # ---- Work independent of the gathered rows (overlaps in-flight DMAs).
    # Token-type embedding: 2 rows -> fused multiply-add select (exact for 0/1).
    tt = tt_ref[0]                                       # (TS, 1) f32
    tok0 = ttab_ref[0:1, :]                              # (1, H)
    tok = tok0 + tt * (ttab_ref[1:2, :] - tok0)          # (TS, H)
    base = pl.multiple_of(st * TS, TS)
    rest = tok * sqrt_h + pe_ref[pl.ds(base, TS), :]     # tok*sqrt(H) + pe tile

    # ---- Drain this tile's gather with ONE aggregate wait: DMA semaphores are
    # byte-counted, so a (TS, H) descriptor balances TS copies of (1, H) each.
    cur = word_buf.at[slot]
    pltpu.make_async_copy(cur, cur, sem.at[slot]).wait()

    # (word + tok) * sqrt(H) + pe, reassociated as word*sqrt(H) + rest.
    words = cur[...].astype(jnp.float32)                 # upcast after landing
    emb = words * sqrt_h + rest                          # (TS, H) f32

    # LayerNorm over hidden dim (eps = 1e-12), single-pass statistics.
    inv_h = jnp.float32(1.0 / H)
    mean = jnp.sum(emb, axis=-1, keepdims=True) * inv_h
    ex2 = jnp.sum(emb * emb, axis=-1, keepdims=True) * inv_h
    var = ex2 - mean * mean
    norm = (emb - mean) * lax.rsqrt(var + jnp.float32(1e-12))
    out_ref[0] = norm * gamma_ref[...] + beta_ref[...]


def _tpu_vmem_capacity_bytes():
    try:
        return int(pltpu.get_tpu_info().vmem_capacity_bytes)
    except Exception:
        return 64 << 20          # conservative: v7x per-TensorCore VMEM


def _live_vmem_bytes(ts, S, H, w_itemsize):
    return (2 * ts * H * w_itemsize      # double-buffered gather scratch
            + 2 * ts * H * 4             # double-buffered output tile
            + 2 * S * H * 4              # resident positional-encoding slab
            + 2 * ts * 128 * 4           # token-type coeff tile (lane padded)
            + 6 * 8 * H * 4)             # ttab / gamma / beta (sublane padded)


def _pick_seq_tile(S, H, w_itemsize, vmem_cap):
    budget = vmem_cap // 2               # headroom for compiler temporaries
    cands = (1024, 512, 256, 128, 64, 32, 16, 8)
    for ts in cands:
        if S % ts == 0 and _live_vmem_bytes(ts, S, H, w_itemsize) <= budget:
            return ts
    for ts in cands:
        if S % ts == 0:
            return ts
    return S                             # full-extent block is always legal


def onmt_bert_embedding(input_ids, token_type_ids, word_table, tok_table,
                        pe_table, gamma, beta):
    B, S = input_ids.shape
    V, H = word_table.shape
    w_itemsize = jnp.dtype(word_table.dtype).itemsize
    vmem_cap = _tpu_vmem_capacity_bytes()
    TS = _pick_seq_tile(S, H, w_itemsize, vmem_cap)
    n_st = S // TS

    ids = input_ids.astype(jnp.int32)                          # -> SMEM prefetch
    tt3 = token_type_ids.astype(jnp.float32).reshape(B, S, 1)  # FMA coefficient
    pe_s = pe_table[:S].astype(jnp.float32)                    # (S, H), resident
    gamma2 = gamma.reshape(1, H).astype(jnp.float32)
    beta2 = beta.reshape(1, H).astype(jnp.float32)
    ttab = tok_table.astype(jnp.float32)
    # word_table is passed through unchanged: it stays in HBM in its native
    # dtype and only the gathered rows ever move.

    vmem_limit = max(16 << 20,
                     min(_live_vmem_bytes(TS, S, H, w_itemsize) + (4 << 20),
                         (vmem_cap * 3) // 4))

    grid_spec = pltpu.PrefetchScalarGridSpec(
        num_scalar_prefetch=1,
        grid=(B, n_st),
        in_specs=[
            pl.BlockSpec((1, TS, 1), lambda b, s, ids: (b, s, 0)),  # token-type coeff
            pl.BlockSpec(memory_space=pl.ANY),                      # word table (HBM)
            pl.BlockSpec((2, H), lambda b, s, ids: (0, 0)),         # token-type table
            pl.BlockSpec((S, H), lambda b, s, ids: (0, 0)),         # pe, loaded once
            pl.BlockSpec((1, H), lambda b, s, ids: (0, 0)),         # LayerNorm gamma
            pl.BlockSpec((1, H), lambda b, s, ids: (0, 0)),         # LayerNorm beta
        ],
        out_specs=pl.BlockSpec((1, TS, H), lambda b, s, ids: (b, s, 0)),
        scratch_shapes=[
            pltpu.VMEM((2, TS, H), word_table.dtype),  # double-buffered gather
            pltpu.SemaphoreType.DMA((2,)),             # one DMA sem per slot
        ],
    )

    return pl.pallas_call(
        _embedding_kernel,
        out_shape=jax.ShapeDtypeStruct((B, S, H), jnp.float32),
        grid_spec=grid_spec,
        compiler_params=pltpu.CompilerParams(
            dimension_semantics=("parallel", "arbitrary"),
            vmem_limit_bytes=int(vmem_limit)),
    )(ids, tt3, word_table, ttab, pe_s, gamma2, beta2)


def make_positional_encoding(dim, max_len):
    """Sinusoidal PE exactly as PositionalEncoding.__init__ builds it."""
    position = jnp.arange(max_len, dtype=jnp.float32)[:, None]          # (L, 1)
    div_term = jnp.exp(jnp.arange(0, dim, 2, dtype=jnp.float32)
                       * (-math.log(10000.0) / dim))                    # (dim/2,)
    pe = jnp.zeros((max_len, dim), dtype=jnp.float32)
    pe = pe.at[:, 0::2].set(jnp.sin(position * div_term))
    pe = pe.at[:, 1::2].set(jnp.cos(position * div_term))
    return pe


def reference(input_ids, token_type_ids, word_table, tok_table, pe_table,
              gamma, beta):
    """Pure-JAX reference of the module's forward (eval mode)."""
    H = word_table.shape[1]
    words = word_table[input_ids].astype(jnp.float32)  # (B, S, H)
    toks = tok_table[token_type_ids]                   # (B, S, H)
    emb = words + toks
    S = input_ids.shape[1]
    emb = emb * math.sqrt(H) + pe_table[:S][None, :, :]
    mean = jnp.mean(emb, axis=-1, keepdims=True)
    var = jnp.mean(jnp.square(emb - mean), axis=-1, keepdims=True)
    norm = (emb - mean) / jnp.sqrt(var + 1e-12)
    return norm * gamma + beta


if __name__ == "__main__":
    B, S, H, V = 2, 16, 128, 512    # small synthetic BertConfig-like sizes
    MAX_POS = 4 * 16                # config.max_position_embeddings * 4

    key = jax.random.PRNGKey(0)
    k_ids, k_tt, k_w, k_t, k_g, k_b = jax.random.split(key, 6)

    input_ids = jax.random.randint(k_ids, (B, S), 0, V, dtype=jnp.int32)
    token_type_ids = jax.random.randint(k_tt, (B, S), 0, 2, dtype=jnp.int32)

    # Word table kept in its "checkpoint" dtype; the kernel gathers it natively.
    word_table = jax.random.normal(k_w, (V, H), dtype=jnp.float32) * 0.02
    tok_table = jax.random.normal(k_t, (2, H), dtype=jnp.float32) * 0.02
    gamma = 1.0 + 0.1 * jax.random.normal(k_g, (H,), dtype=jnp.float32)
    beta = 0.1 * jax.random.normal(k_b, (H,), dtype=jnp.float32)
    pe_table = make_positional_encoding(H, MAX_POS)

    out = onmt_bert_embedding(input_ids, token_type_ids, word_table, tok_table,
                              pe_table, gamma, beta)
    out = jax.block_until_ready(out)

    ref = reference(input_ids, token_type_ids, word_table, tok_table,
                    pe_table, gamma, beta)
    assert out.shape == (B, S, H)
    assert jnp.allclose(out, ref, atol=2e-5, rtol=2e-5), "mismatch vs reference"

    print("KERNEL_OK")
</pallas_src>

<mosaic_0001>
module attributes {stable_mosaic.version = 11 : i64} {
  func.func @_embedding_kernel(%arg0: i32, %arg1: i32, %arg2: memref<2x16xi32, #tpu.memory_space<smem>>, %arg3: memref<1x16x1xf32, #tpu.memory_space<vmem>>, %arg4: memref<512x128xf32, #tpu.memory_space<any>>, %arg5: memref<2x128xf32, #tpu.memory_space<vmem>>, %arg6: memref<16x128xf32, #tpu.memory_space<vmem>>, %arg7: memref<1x128xf32, #tpu.memory_space<vmem>>, %arg8: memref<1x128xf32, #tpu.memory_space<vmem>>, %arg9: memref<1x16x128xf32, #tpu.memory_space<vmem>>, %arg10: memref<2x16x128xf32, #tpu.memory_space<vmem>>, %arg11: memref<2x!tpu.dma_semaphore, #tpu.memory_space<semaphore_mem>>) attributes {dimension_semantics = [#tpu.dimension_semantics<parallel>, #tpu.dimension_semantics<arbitrary>], iteration_bounds = array<i64: 2, 1>, scalar_prefetch = 1 : i64, scratch_operands = 2 : i64, tpu.core_type = #tpu.core_type<tc>, window_params = [{transform_indices = @transform_0, window_bounds = array<i64: 1, 16, 1>}, {}, {pipeline_mode = #tpu.pipeline_mode<synchronous>, transform_indices = @transform_2, window_bounds = array<i64: 2, 128>}, {pipeline_mode = #tpu.pipeline_mode<synchronous>, transform_indices = @transform_3, window_bounds = array<i64: 16, 128>}, {pipeline_mode = #tpu.pipeline_mode<synchronous>, transform_indices = @transform_4, window_bounds = array<i64: 1, 128>}, {pipeline_mode = #tpu.pipeline_mode<synchronous>, transform_indices = @transform_5, window_bounds = array<i64: 1, 128>}, {transform_indices = @transform_6, window_bounds = array<i64: 1, 16, 128>}]} {
    %c2_i32 = arith.constant 2 : i32
    %0 = arith.remsi %arg1, %c2_i32 : i32
    %c0_i32 = arith.constant 0 : i32
    %1 = arith.cmpi eq, %arg1, %c0_i32 : i32
    %2 = arith.extui %1 : i1 to i32
    %c0_i32_0 = arith.constant 0 : i32
    %3 = arith.cmpi ne, %2, %c0_i32_0 : i32
    scf.if %3 {
      %c0_i32_28 = arith.constant 0 : i32
      %c0_i32_29 = arith.constant 0 : i32
      %c0_i32_30 = arith.constant 0 : i32
      %c2_i32_31 = arith.constant 2 : i32
      %64 = arith.addi %c0_i32_30, %c2_i32_31 : i32
      %c1_i32_32 = arith.constant 1 : i32
      scf.for %arg12 = %c0_i32_30 to %64 step %c1_i32_32  : i32 {
        %c1_i32_34 = arith.constant 1 : i32
        %65 = arith.muli %arg12, %c1_i32_34 : i32
        %c0_i32_35 = arith.constant 0 : i32
        %66 = arith.addi %c0_i32_35, %65 : i32
        %c8_i32 = arith.constant 8 : i32
        %67 = arith.muli %66, %c8_i32 : i32
        %68 = tpu.assume_multiple %67, 8 : i32
        %c0_i32_36 = arith.constant 0 : i32
        %69 = arith.addi %68, %c0_i32_36 : i32
        %c0_i32_37 = arith.constant 0 : i32
        %70 = arith.addi %c0_i32_37, %69 : i32
        %71 = arith.index_cast %arg0 : i32 to index
        %72 = arith.index_cast %70 : i32 to index
        %73 = memref.load %arg2[%71, %72] : memref<2x16xi32, #tpu.memory_space<smem>>
        %c0_i32_38 = arith.constant 0 : i32
        %c511_i32 = arith.constant 511 : i32
        %74 = arith.maxsi %c0_i32_38, %73 : i32
        %75 = arith.minsi %c511_i32, %74 : i32
        %c0_i32_39 = arith.constant 0 : i32
        %76 = tpu.memref_slice %arg4[%75, %c0_i32_39] : memref<512x128xf32, #tpu.memory_space<any>> -> memref<1x128xf32, #tpu.memory_space<any>>
        %c0_i32_40 = arith.constant 0 : i32
        %c0_i32_41 = arith.constant 0 : i32
        %77 = tpu.memref_slice %arg10[%c0_i32_28, %c0_i32_40, %c0_i32_41] : memref<2x16x128xf32, #tpu.memory_space<vmem>> -> memref<1x16x128xf32, #tpu.memory_space<vmem>>
        %78 = tpu.memref_squeeze %77 : memref<1x16x128xf32, #tpu.memory_space<vmem>> -> memref<16x128xf32, #tpu.memory_space<vmem>>
        %c0_i32_42 = arith.constant 0 : i32
        %79 = tpu.memref_slice %78[%69, %c0_i32_42] : memref<16x128xf32, #tpu.memory_space<vmem>> -> memref<1x128xf32, #tpu.memory_space<vmem>>
        %80 = tpu.memref_slice %arg11[%c0_i32_29] : memref<2x!tpu.dma_semaphore, #tpu.memory_space<semaphore_mem>> -> memref<1x!tpu.dma_semaphore, #tpu.memory_space<semaphore_mem>>
        %81 = tpu.memref_squeeze %80 : memref<1x!tpu.dma_semaphore, #tpu.memory_space<semaphore_mem>> -> memref<!tpu.dma_semaphore, #tpu.memory_space<semaphore_mem>>
        tpu.enqueue_dma source(%76 : memref<1x128xf32, #tpu.memory_space<any>>) target(%79 : memref<1x128xf32, #tpu.memory_space<vmem>>) target_semaphore(%81 : memref<!tpu.dma_semaphore, #tpu.memory_space<semaphore_mem>>)
        %c1_i32_43 = arith.constant 1 : i32
        %82 = arith.addi %68, %c1_i32_43 : i32
        %c0_i32_44 = arith.constant 0 : i32
        %83 = arith.addi %c0_i32_44, %82 : i32
        %84 = arith.index_cast %arg0 : i32 to index
        %85 = arith.index_cast %83 : i32 to index
        %86 = memref.load %arg2[%84, %85] : memref<2x16xi32, #tpu.memory_space<smem>>
        %c0_i32_45 = arith.constant 0 : i32
        %c511_i32_46 = arith.constant 511 : i32
        %87 = arith.maxsi %c0_i32_45, %86 : i32
        %88 = arith.minsi %c511_i32_46, %87 : i32
        %c0_i32_47 = arith.constant 0 : i32
        %89 = tpu.memref_slice %arg4[%88, %c0_i32_47] : memref<512x128xf32, #tpu.memory_space<any>> -> memref<1x128xf32, #tpu.memory_space<any>>
        %c0_i32_48 = arith.constant 0 : i32
        %c0_i32_49 = arith.constant 0 : i32
        %90 = tpu.memref_slice %arg10[%c0_i32_28, %c0_i32_48, %c0_i32_49] : memref<2x16x128xf32, #tpu.memory_space<vmem>> -> memref<1x16x128xf32, #tpu.memory_space<vmem>>
        %91 = tpu.memref_squeeze %90 : memref<1x16x128xf32, #tpu.memory_space<vmem>> -> memref<16x128xf32, #tpu.memory_space<vmem>>
        %c0_i32_50 = arith.constant 0 : i32
        %92 = tpu.memref_slice %91[%82, %c0_i32_50] : memref<16x128xf32, #tpu.memory_space<vmem>> -> memref<1x128xf32, #tpu.memory_space<vmem>>
        %93 = tpu.memref_slice %arg11[%c0_i32_29] : memref<2x!tpu.dma_semaphore, #tpu.memory_space<semaphore_mem>> -> memref<1x!tpu.dma_semaphore, #tpu.memory_space<semaphore_mem>>
        %94 = tpu.memref_squeeze %93 : memref<1x!tpu.dma_semaphore, #tpu.memory_space<semaphore_mem>> -> memref<!tpu.dma_semaphore, #tpu.memory_space<semaphore_mem>>
        tpu.enqueue_dma source(%89 : memref<1x128xf32, #tpu.memory_space<any>>) target(%92 : memref<1x128xf32, #tpu.memory_space<vmem>>) target_semaphore(%94 : memref<!tpu.dma_semaphore, #tpu.memory_space<semaphore_mem>>)
        %c2_i32_51 = arith.constant 2 : i32
        %95 = arith.addi %68, %c2_i32_51 : i32
        %c0_i32_52 = arith.constant 0 : i32
        %96 = arith.addi %c0_i32_52, %95 : i32
        %97 = arith.index_cast %arg0 : i32 to index
        %98 = arith.index_cast %96 : i32 to index
        %99 = memref.load %arg2[%97, %98] : memref<2x16xi32, #tpu.memory_space<smem>>
        %c0_i32_53 = arith.constant 0 : i32
        %c511_i32_54 = arith.constant 511 : i32
        %100 = arith.maxsi %c0_i32_53, %99 : i32
        %101 = arith.minsi %c511_i32_54, %100 : i32
        %c0_i32_55 = arith.constant 0 : i32
        %102 = tpu.memref_slice %arg4[%101, %c0_i32_55] : memref<512x128xf32, #tpu.memory_space<any>> -> memref<1x128xf32, #tpu.memory_space<any>>
        %c0_i32_56 = arith.constant 0 : i32
        %c0_i32_57 = arith.constant 0 : i32
        %103 = tpu.memref_slice %arg10[%c0_i32_28, %c0_i32_56, %c0_i32_57] : memref<2x16x128xf32, #tpu.memory_space<vmem>> -> memref<1x16x128xf32, #tpu.memory_space<vmem>>
        %104 = tpu.memref_squeeze %103 : memref<1x16x128xf32, #tpu.memory_space<vmem>> -> memref<16x128xf32, #tpu.memory_space<vmem>>
        %c0_i32_58 = arith.constant 0 : i32
        %105 = tpu.memref_slice %104[%95, %c0_i32_58] : memref<16x128xf32, #tpu.memory_space<vmem>> -> memref<1x128xf32, #tpu.memory_space<vmem>>
        %106 = tpu.memref_slice %arg11[%c0_i32_29] : memref<2x!tpu.dma_semaphore, #tpu.memory_space<semaphore_mem>> -> memref<1x!tpu.dma_semaphore, #tpu.memory_space<semaphore_mem>>
        %107 = tpu.memref_squeeze %106 : memref<1x!tpu.dma_semaphore, #tpu.memory_space<semaphore_mem>> -> memref<!tpu.dma_semaphore, #tpu.memory_space<semaphore_mem>>
        tpu.enqueue_dma source(%102 : memref<1x128xf32, #tpu.memory_space<any>>) target(%105 : memref<1x128xf32, #tpu.memory_space<vmem>>) target_semaphore(%107 : memref<!tpu.dma_semaphore, #tpu.memory_space<semaphore_mem>>)
        %c3_i32 = arith.constant 3 : i32
        %108 = arith.addi %68, %c3_i32 : i32
        %c0_i32_59 = arith.constant 0 : i32
        %109 = arith.addi %c0_i32_59, %108 : i32
        %110 = arith.index_cast %arg0 : i32 to index
        %111 = arith.index_cast %109 : i32 to index
        %112 = memref.load %arg2[%110, %111] : memref<2x16xi32, #tpu.memory_space<smem>>
        %c0_i32_60 = arith.constant 0 : i32
        %c511_i32_61 = arith.constant 511 : i32
        %113 = arith.maxsi %c0_i32_60, %112 : i32
        %114 = arith.minsi %c511_i32_61, %113 : i32
        %c0_i32_62 = arith.constant 0 : i32
        %115 = tpu.memref_slice %arg4[%114, %c0_i32_62] : memref<512x128xf32, #tpu.memory_space<any>> -> memref<1x128xf32, #tpu.memory_space<any>>
        %c0_i32_63 = arith.constant 0 : i32
        %c0_i32_64 = arith.constant 0 : i32
        %116 = tpu.memref_slice %arg10[%c0_i32_28, %c0_i32_63, %c0_i32_64] : memref<2x16x128xf32, #tpu.memory_space<vmem>> -> memref<1x16x128xf32, #tpu.memory_space<vmem>>
        %117 = tpu.memref_squeeze %116 : memref<1x16x128xf32, #tpu.memory_space<vmem>> -> memref<16x128xf32, #tpu.memory_space<vmem>>
        %c0_i32_65 = arith.constant 0 : i32
        %118 = tpu.memref_slice %117[%108, %c0_i32_65] : memref<16x128xf32, #tpu.memory_space<vmem>> -> memref<1x128xf32, #tpu.memory_space<vmem>>
        %119 = tpu.memref_slice %arg11[%c0_i32_29] : memref<2x!tpu.dma_semaphore, #tpu.memory_space<semaphore_mem>> -> memref<1x!tpu.dma_semaphore, #tpu.memory_space<semaphore_mem>>
        %120 = tpu.memref_squeeze %119 : memref<1x!tpu.dma_semaphore, #tpu.memory_space<semaphore_mem>> -> memref<!tpu.dma_semaphore, #tpu.memory_space<semaphore_mem>>
        tpu.enqueue_dma source(%115 : memref<1x128xf32, #tpu.memory_space<any>>) target(%118 : memref<1x128xf32, #tpu.memory_space<vmem>>) target_semaphore(%120 : memref<!tpu.dma_semaphore, #tpu.memory_space<semaphore_mem>>)
        %c4_i32 = arith.constant 4 : i32
        %121 = arith.addi %68, %c4_i32 : i32
        %c0_i32_66 = arith.constant 0 : i32
        %122 = arith.addi %c0_i32_66, %121 : i32
        %123 = arith.index_cast %arg0 : i32 to index
        %124 = arith.index_cast %122 : i32 to index
        %125 = memref.load %arg2[%123, %124] : memref<2x16xi32, #tpu.memory_space<smem>>
        %c0_i32_67 = arith.constant 0 : i32
        %c511_i32_68 = arith.constant 511 : i32
        %126 = arith.maxsi %c0_i32_67, %125 : i32
        %127 = arith.minsi %c511_i32_68, %126 : i32
        %c0_i32_69 = arith.constant 0 : i32
        %128 = tpu.memref_slice %arg4[%127, %c0_i32_69] : memref<512x128xf32, #tpu.memory_space<any>> -> memref<1x128xf32, #tpu.memory_space<any>>
        %c0_i32_70 = arith.constant 0 : i32
        %c0_i32_71 = arith.constant 0 : i32
        %129 = tpu.memref_slice %arg10[%c0_i32_28, %c0_i32_70, %c0_i32_71] : memref<2x16x128xf32, #tpu.memory_space<vmem>> -> memref<1x16x128xf32, #tpu.memory_space<vmem>>
        %130 = tpu.memref_squeeze %129 : memref<1x16x128xf32, #tpu.memory_space<vmem>> -> memref<16x128xf32, #tpu.memory_space<vmem>>
        %c0_i32_72 = arith.constant 0 : i32
        %131 = tpu.memref_slice %130[%121, %c0_i32_72] : memref<16x128xf32, #tpu.memory_space<vmem>> -> memref<1x128xf32, #tpu.memory_space<vmem>>
        %132 = tpu.memref_slice %arg11[%c0_i32_29] : memref<2x!tpu.dma_semaphore, #tpu.memory_space<semaphore_mem>> -> memref<1x!tpu.dma_semaphore, #tpu.memory_space<semaphore_mem>>
        %133 = tpu.memref_squeeze %132 : memref<1x!tpu.dma_semaphore, #tpu.memory_space<semaphore_mem>> -> memref<!tpu.dma_semaphore, #tpu.memory_space<semaphore_mem>>
        tpu.enqueue_dma source(%128 : memref<1x128xf32, #tpu.memory_space<any>>) target(%131 : memref<1x128xf32, #tpu.memory_space<vmem>>) target_semaphore(%133 : memref<!tpu.dma_semaphore, #tpu.memory_space<semaphore_mem>>)
        %c5_i32 = arith.constant 5 : i32
        %134 = arith.addi %68, %c5_i32 : i32
        %c0_i32_73 = arith.constant 0 : i32
        %135 = arith.addi %c0_i32_73, %134 : i32
        %136 = arith.index_cast %arg0 : i32 to index
        %137 = arith.index_cast %135 : i32 to index
        %138 = memref.load %arg2[%136, %137] : memref<2x16xi32, #tpu.memory_space<smem>>
        %c0_i32_74 = arith.constant 0 : i32
        %c511_i32_75 = arith.constant 511 : i32
        %139 = arith.maxsi %c0_i32_74, %138 : i32
        %140 = arith.minsi %c511_i32_75, %139 : i32
        %c0_i32_76 = arith.constant 0 : i32
        %141 = tpu.memref_slice %arg4[%140, %c0_i32_76] : memref<512x128xf32, #tpu.memory_space<any>> -> memref<1x128xf32, #tpu.memory_space<any>>
        %c0_i32_77 = arith.constant 0 : i32
        %c0_i32_78 = arith.constant 0 : i32
        %142 = tpu.memref_slice %arg10[%c0_i32_28, %c0_i32_77, %c0_i32_78] : memref<2x16x128xf32, #tpu.memory_space<vmem>> -> memref<1x16x128xf32, #tpu.memory_space<vmem>>
        %143 = tpu.memref_squeeze %142 : memref<1x16x128xf32, #tpu.memory_space<vmem>> -> memref<16x128xf32, #tpu.memory_space<vmem>>
        %c0_i32_79 = arith.constant 0 : i32
        %144 = tpu.memref_slice %143[%134, %c0_i32_79] : memref<16x128xf32, #tpu.memory_space<vmem>> -> memref<1x128xf32, #tpu.memory_space<vmem>>
        %145 = tpu.memref_slice %arg11[%c0_i32_29] : memref<2x!tpu.dma_semaphore, #tpu.memory_space<semaphore_mem>> -> memref<1x!tpu.dma_semaphore, #tpu.memory_space<semaphore_mem>>
        %146 = tpu.memref_squeeze %145 : memref<1x!tpu.dma_semaphore, #tpu.memory_space<semaphore_mem>> -> memref<!tpu.dma_semaphore, #tpu.memory_space<semaphore_mem>>
        tpu.enqueue_dma source(%141 : memref<1x128xf32, #tpu.memory_space<any>>) target(%144 : memref<1x128xf32, #tpu.memory_space<vmem>>) target_semaphore(%146 : memref<!tpu.dma_semaphore, #tpu.memory_space<semaphore_mem>>)
        %c6_i32 = arith.constant 6 : i32
        %147 = arith.addi %68, %c6_i32 : i32
        %c0_i32_80 = arith.constant 0 : i32
        %148 = arith.addi %c0_i32_80, %147 : i32
        %149 = arith.index_cast %arg0 : i32 to index
        %150 = arith.index_cast %148 : i32 to index
        %151 = memref.load %arg2[%149, %150] : memref<2x16xi32, #tpu.memory_space<smem>>
        %c0_i32_81 = arith.constant 0 : i32
        %c511_i32_82 = arith.constant 511 : i32
        %152 = arith.maxsi %c0_i32_81, %151 : i32
        %153 = arith.minsi %c511_i32_82, %152 : i32
        %c0_i32_83 = arith.constant 0 : i32
        %154 = tpu.memref_slice %arg4[%153, %c0_i32_83] : memref<512x128xf32, #tpu.memory_space<any>> -> memref<1x128xf32, #tpu.memory_space<any>>
        %c0_i32_84 = arith.constant 0 : i32
        %c0_i32_85 = arith.constant 0 : i32
        %155 = tpu.memref_slice %arg10[%c0_i32_28, %c0_i32_84, %c0_i32_85] : memref<2x16x128xf32, #tpu.memory_space<vmem>> -> memref<1x16x128xf32, #tpu.memory_space<vmem>>
        %156 = tpu.memref_squeeze %155 : memref<1x16x128xf32, #tpu.memory_space<vmem>> -> memref<16x128xf32, #tpu.memory_space<vmem>>
        %c0_i32_86 = arith.constant 0 : i32
        %157 = tpu.memref_slice %156[%147, %c0_i32_86] : memref<16x128xf32, #tpu.memory_space<vmem>> -> memref<1x128xf32, #tpu.memory_space<vmem>>
        %158 = tpu.memref_slice %arg11[%c0_i32_29] : memref<2x!tpu.dma_semaphore, #tpu.memory_space<semaphore_mem>> -> memref<1x!tpu.dma_semaphore, #tpu.memory_space<semaphore_mem>>
        %159 = tpu.memref_squeeze %158 : memref<1x!tpu.dma_semaphore, #tpu.memory_space<semaphore_mem>> -> memref<!tpu.dma_semaphore, #tpu.memory_space<semaphore_mem>>
        tpu.enqueue_dma source(%154 : memref<1x128xf32, #tpu.memory_space<any>>) target(%157 : memref<1x128xf32, #tpu.memory_space<vmem>>) target_semaphore(%159 : memref<!tpu.dma_semaphore, #tpu.memory_space<semaphore_mem>>)
        %c7_i32 = arith.constant 7 : i32
        %160 = arith.addi %68, %c7_i32 : i32
        %c0_i32_87 = arith.constant 0 : i32
        %161 = arith.addi %c0_i32_87, %160 : i32
        %162 = arith.index_cast %arg0 : i32 to index
        %163 = arith.index_cast %161 : i32 to index
        %164 = memref.load %arg2[%162, %163] : memref<2x16xi32, #tpu.memory_space<smem>>
        %c0_i32_88 = arith.constant 0 : i32
        %c511_i32_89 = arith.constant 511 : i32
        %165 = arith.maxsi %c0_i32_88, %164 : i32
        %166 = arith.minsi %c511_i32_89, %165 : i32
        %c0_i32_90 = arith.constant 0 : i32
        %167 = tpu.memref_slice %arg4[%166, %c0_i32_90] : memref<512x128xf32, #tpu.memory_space<any>> -> memref<1x128xf32, #tpu.memory_space<any>>
        %c0_i32_91 = arith.constant 0 : i32
        %c0_i32_92 = arith.constant 0 : i32
        %168 = tpu.memref_slice %arg10[%c0_i32_28, %c0_i32_91, %c0_i32_92] : memref<2x16x128xf32, #tpu.memory_space<vmem>> -> memref<1x16x128xf32, #tpu.memory_space<vmem>>
        %169 = tpu.memref_squeeze %168 : memref<1x16x128xf32, #tpu.memory_space<vmem>> -> memref<16x128xf32, #tpu.memory_space<vmem>>
        %c0_i32_93 = arith.constant 0 : i32
        %170 = tpu.memref_slice %169[%160, %c0_i32_93] : memref<16x128xf32, #tpu.memory_space<vmem>> -> memref<1x128xf32, #tpu.memory_space<vmem>>
        %171 = tpu.memref_slice %arg11[%c0_i32_29] : memref<2x!tpu.dma_semaphore, #tpu.memory_space<semaphore_mem>> -> memref<1x!tpu.dma_semaphore, #tpu.memory_space<semaphore_mem>>
        %172 = tpu.memref_squeeze %171 : memref<1x!tpu.dma_semaphore, #tpu.memory_space<semaphore_mem>> -> memref<!tpu.dma_semaphore, #tpu.memory_space<semaphore_mem>>
        tpu.enqueue_dma source(%167 : memref<1x128xf32, #tpu.memory_space<any>>) target(%170 : memref<1x128xf32, #tpu.memory_space<vmem>>) target_semaphore(%172 : memref<!tpu.dma_semaphore, #tpu.memory_space<semaphore_mem>>)
      }
      %c2_i32_33 = arith.constant 2 : i32
    } else {
    }
    %c1_i32 = arith.constant 1 : i32
    %4 = arith.addi %arg1, %c1_i32 : i32
    %c1_i32_1 = arith.constant 1 : i32
    %5 = arith.cmpi slt, %4, %c1_i32_1 : i32
    %6 = arith.extui %5 : i1 to i32
    %c0_i32_2 = arith.constant 0 : i32
    %7 = arith.cmpi ne, %6, %c0_i32_2 : i32
    scf.if %7 {
      %c1_i32_28 = arith.constant 1 : i32
      %64 = arith.addi %arg1, %c1_i32_28 : i32
      %c1_i32_29 = arith.constant 1 : i32
      %65 = arith.subi %c1_i32_29, %0 : i32
      %c16_i32_30 = arith.constant 16 : i32
      %66 = arith.muli %64, %c16_i32_30 : i32
      %c0_i32_31 = arith.constant 0 : i32
      %c2_i32_32 = arith.constant 2 : i32
      %67 = arith.addi %c0_i32_31, %c2_i32_32 : i32
      %c1_i32_33 = arith.constant 1 : i32
      scf.for %arg12 = %c0_i32_31 to %67 step %c1_i32_33  : i32 {
        %c1_i32_35 = arith.constant 1 : i32
        %68 = arith.muli %arg12, %c1_i32_35 : i32
        %c0_i32_36 = arith.constant 0 : i32
        %69 = arith.addi %c0_i32_36, %68 : i32
        %c8_i32 = arith.constant 8 : i32
        %70 = arith.muli %69, %c8_i32 : i32
        %71 = tpu.assume_multiple %70, 8 : i32
        %c0_i32_37 = arith.constant 0 : i32
        %72 = arith.addi %71, %c0_i32_37 : i32
        %73 = arith.addi %66, %72 : i32
        %74 = arith.index_cast %arg0 : i32 to index
        %75 = arith.index_cast %73 : i32 to index
        %76 = memref.load %arg2[%74, %75] : memref<2x16xi32, #tpu.memory_space<smem>>
        %c0_i32_38 = arith.constant 0 : i32
        %c511_i32 = arith.constant 511 : i32
        %77 = arith.maxsi %c0_i32_38, %76 : i32
        %78 = arith.minsi %c511_i32, %77 : i32
        %c0_i32_39 = arith.constant 0 : i32
        %79 = tpu.memref_slice %arg4[%78, %c0_i32_39] : memref<512x128xf32, #tpu.memory_space<any>> -> memref<1x128xf32, #tpu.memory_space<any>>
        %c0_i32_40 = arith.constant 0 : i32
        %c0_i32_41 = arith.constant 0 : i32
        %80 = tpu.memref_slice %arg10[%65, %c0_i32_40, %c0_i32_41] : memref<2x16x128xf32, #tpu.memory_space<vmem>> -> memref<1x16x128xf32, #tpu.memory_space<vmem>>
        %81 = tpu.memref_squeeze %80 : memref<1x16x128xf32, #tpu.memory_space<vmem>> -> memref<16x128xf32, #tpu.memory_space<vmem>>
        %c0_i32_42 = arith.constant 0 : i32
        %82 = tpu.memref_slice %81[%72, %c0_i32_42] : memref<16x128xf32, #tpu.memory_space<vmem>> -> memref<1x128xf32, #tpu.memory_space<vmem>>
        %83 = tpu.memref_slice %arg11[%65] : memref<2x!tpu.dma_semaphore, #tpu.memory_space<semaphore_mem>> -> memref<1x!tpu.dma_semaphore, #tpu.memory_space<semaphore_mem>>
        %84 = tpu.memref_squeeze %83 : memref<1x!tpu.dma_semaphore, #tpu.memory_space<semaphore_mem>> -> memref<!tpu.dma_semaphore, #tpu.memory_space<semaphore_mem>>
        tpu.enqueue_dma source(%79 : memref<1x128xf32, #tpu.memory_space<any>>) target(%82 : memref<1x128xf32, #tpu.memory_space<vmem>>) target_semaphore(%84 : memref<!tpu.dma_semaphore, #tpu.memory_space<semaphore_mem>>)
        %c1_i32_43 = arith.constant 1 : i32
        %85 = arith.addi %71, %c1_i32_43 : i32
        %86 = arith.addi %66, %85 : i32
        %87 = arith.index_cast %arg0 : i32 to index
        %88 = arith.index_cast %86 : i32 to index
        %89 = memref.load %arg2[%87, %88] : memref<2x16xi32, #tpu.memory_space<smem>>
        %c0_i32_44 = arith.constant 0 : i32
        %c511_i32_45 = arith.constant 511 : i32
        %90 = arith.maxsi %c0_i32_44, %89 : i32
        %91 = arith.minsi %c511_i32_45, %90 : i32
        %c0_i32_46 = arith.constant 0 : i32
        %92 = tpu.memref_slice %arg4[%91, %c0_i32_46] : memref<512x128xf32, #tpu.memory_space<any>> -> memref<1x128xf32, #tpu.memory_space<any>>
        %c0_i32_47 = arith.constant 0 : i32
        %c0_i32_48 = arith.constant 0 : i32
        %93 = tpu.memref_slice %arg10[%65, %c0_i32_47, %c0_i32_48] : memref<2x16x128xf32, #tpu.memory_space<vmem>> -> memref<1x16x128xf32, #tpu.memory_space<vmem>>
        %94 = tpu.memref_squeeze %93 : memref<1x16x128xf32, #tpu.memory_space<vmem>> -> memref<16x128xf32, #tpu.memory_space<vmem>>
        %c0_i32_49 = arith.constant 0 : i32
        %95 = tpu.memref_slice %94[%85, %c0_i32_49] : memref<16x128xf32, #tpu.memory_space<vmem>> -> memref<1x128xf32, #tpu.memory_space<vmem>>
        %96 = tpu.memref_slice %arg11[%65] : memref<2x!tpu.dma_semaphore, #tpu.memory_space<semaphore_mem>> -> memref<1x!tpu.dma_semaphore, #tpu.memory_space<semaphore_mem>>
        %97 = tpu.memref_squeeze %96 : memref<1x!tpu.dma_semaphore, #tpu.memory_space<semaphore_mem>> -> memref<!tpu.dma_semaphore, #tpu.memory_space<semaphore_mem>>
        tpu.enqueue_dma source(%92 : memref<1x128xf32, #tpu.memory_space<any>>) target(%95 : memref<1x128xf32, #tpu.memory_space<vmem>>) target_semaphore(%97 : memref<!tpu.dma_semaphore, #tpu.memory_space<semaphore_mem>>)
        %c2_i32_50 = arith.constant 2 : i32
        %98 = arith.addi %71, %c2_i32_50 : i32
        %99 = arith.addi %66, %98 : i32
        %100 = arith.index_cast %arg0 : i32 to index
        %101 = arith.index_cast %99 : i32 to index
        %102 = memref.load %arg2[%100, %101] : memref<2x16xi32, #tpu.memory_space<smem>>
        %c0_i32_51 = arith.constant 0 : i32
        %c511_i32_52 = arith.constant 511 : i32
        %103 = arith.maxsi %c0_i32_51, %102 : i32
        %104 = arith.minsi %c511_i32_52, %103 : i32
        %c0_i32_53 = arith.constant 0 : i32
        %105 = tpu.memref_slice %arg4[%104, %c0_i32_53] : memref<512x128xf32, #tpu.memory_space<any>> -> memref<1x128xf32, #tpu.memory_space<any>>
        %c0_i32_54 = arith.constant 0 : i32
        %c0_i32_55 = arith.constant 0 : i32
        %106 = tpu.memref_slice %arg10[%65, %c0_i32_54, %c0_i32_55] : memref<2x16x128xf32, #tpu.memory_space<vmem>> -> memref<1x16x128xf32, #tpu.memory_space<vmem>>
        %107 = tpu.memref_squeeze %106 : memref<1x16x128xf32, #tpu.memory_space<vmem>> -> memref<16x128xf32, #tpu.memory_space<vmem>>
        %c0_i32_56 = arith.constant 0 : i32
        %108 = tpu.memref_slice %107[%98, %c0_i32_56] : memref<16x128xf32, #tpu.memory_space<vmem>> -> memref<1x128xf32, #tpu.memory_space<vmem>>
        %109 = tpu.memref_slice %arg11[%65] : memref<2x!tpu.dma_semaphore, #tpu.memory_space<semaphore_mem>> -> memref<1x!tpu.dma_semaphore, #tpu.memory_space<semaphore_mem>>
        %110 = tpu.memref_squeeze %109 : memref<1x!tpu.dma_semaphore, #tpu.memory_space<semaphore_mem>> -> memref<!tpu.dma_semaphore, #tpu.memory_space<semaphore_mem>>
        tpu.enqueue_dma source(%105 : memref<1x128xf32, #tpu.memory_space<any>>) target(%108 : memref<1x128xf32, #tpu.memory_space<vmem>>) target_semaphore(%110 : memref<!tpu.dma_semaphore, #tpu.memory_space<semaphore_mem>>)
        %c3_i32 = arith.constant 3 : i32
        %111 = arith.addi %71, %c3_i32 : i32
        %112 = arith.addi %66, %111 : i32
        %113 = arith.index_cast %arg0 : i32 to index
        %114 = arith.index_cast %112 : i32 to index
        %115 = memref.load %arg2[%113, %114] : memref<2x16xi32, #tpu.memory_space<smem>>
        %c0_i32_57 = arith.constant 0 : i32
        %c511_i32_58 = arith.constant 511 : i32
        %116 = arith.maxsi %c0_i32_57, %115 : i32
        %117 = arith.minsi %c511_i32_58, %116 : i32
        %c0_i32_59 = arith.constant 0 : i32
        %118 = tpu.memref_slice %arg4[%117, %c0_i32_59] : memref<512x128xf32, #tpu.memory_space<any>> -> memref<1x128xf32, #tpu.memory_space<any>>
        %c0_i32_60 = arith.constant 0 : i32
        %c0_i32_61 = arith.constant 0 : i32
        %119 = tpu.memref_slice %arg10[%65, %c0_i32_60, %c0_i32_61] : memref<2x16x128xf32, #tpu.memory_space<vmem>> -> memref<1x16x128xf32, #tpu.memory_space<vmem>>
        %120 = tpu.memref_squeeze %119 : memref<1x16x128xf32, #tpu.memory_space<vmem>> -> memref<16x128xf32, #tpu.memory_space<vmem>>
        %c0_i32_62 = arith.constant 0 : i32
        %121 = tpu.memref_slice %120[%111, %c0_i32_62] : memref<16x128xf32, #tpu.memory_space<vmem>> -> memref<1x128xf32, #tpu.memory_space<vmem>>
        %122 = tpu.memref_slice %arg11[%65] : memref<2x!tpu.dma_semaphore, #tpu.memory_space<semaphore_mem>> -> memref<1x!tpu.dma_semaphore, #tpu.memory_space<semaphore_mem>>
        %123 = tpu.memref_squeeze %122 : memref<1x!tpu.dma_semaphore, #tpu.memory_space<semaphore_mem>> -> memref<!tpu.dma_semaphore, #tpu.memory_space<semaphore_mem>>
        tpu.enqueue_dma source(%118 : memref<1x128xf32, #tpu.memory_space<any>>) target(%121 : memref<1x128xf32, #tpu.memory_space<vmem>>) target_semaphore(%123 : memref<!tpu.dma_semaphore, #tpu.memory_space<semaphore_mem>>)
        %c4_i32 = arith.constant 4 : i32
        %124 = arith.addi %71, %c4_i32 : i32
        %125 = arith.addi %66, %124 : i32
        %126 = arith.index_cast %arg0 : i32 to index
        %127 = arith.index_cast %125 : i32 to index
        %128 = memref.load %arg2[%126, %127] : memref<2x16xi32, #tpu.memory_space<smem>>
        %c0_i32_63 = arith.constant 0 : i32
        %c511_i32_64 = arith.constant 511 : i32
        %129 = arith.maxsi %c0_i32_63, %128 : i32
        %130 = arith.minsi %c511_i32_64, %129 : i32
        %c0_i32_65 = arith.constant 0 : i32
        %131 = tpu.memref_slice %arg4[%130, %c0_i32_65] : memref<512x128xf32, #tpu.memory_space<any>> -> memref<1x128xf32, #tpu.memory_space<any>>
        %c0_i32_66 = arith.constant 0 : i32
        %c0_i32_67 = arith.constant 0 : i32
        %132 = tpu.memref_slice %arg10[%65, %c0_i32_66, %c0_i32_67] : memref<2x16x128xf32, #tpu.memory_space<vmem>> -> memref<1x16x128xf32, #tpu.memory_space<vmem>>
        %133 = tpu.memref_squeeze %132 : memref<1x16x128xf32, #tpu.memory_space<vmem>> -> memref<16x128xf32, #tpu.memory_space<vmem>>
        %c0_i32_68 = arith.constant 0 : i32
        %134 = tpu.memref_slice %133[%124, %c0_i32_68] : memref<16x128xf32, #tpu.memory_space<vmem>> -> memref<1x128xf32, #tpu.memory_space<vmem>>
        %135 = tpu.memref_slice %arg11[%65] : memref<2x!tpu.dma_semaphore, #tpu.memory_space<semaphore_mem>> -> memref<1x!tpu.dma_semaphore, #tpu.memory_space<semaphore_mem>>
        %136 = tpu.memref_squeeze %135 : memref<1x!tpu.dma_semaphore, #tpu.memory_space<semaphore_mem>> -> memref<!tpu.dma_semaphore, #tpu.memory_space<semaphore_mem>>
        tpu.enqueue_dma source(%131 : memref<1x128xf32, #tpu.memory_space<any>>) target(%134 : memref<1x128xf32, #tpu.memory_space<vmem>>) target_semaphore(%136 : memref<!tpu.dma_semaphore, #tpu.memory_space<semaphore_mem>>)
        %c5_i32 = arith.constant 5 : i32
        %137 = arith.addi %71, %c5_i32 : i32
        %138 = arith.addi %66, %137 : i32
        %139 = arith.index_cast %arg0 : i32 to index
        %140 = arith.index_cast %138 : i32 to index
        %141 = memref.load %arg2[%139, %140] : memref<2x16xi32, #tpu.memory_space<smem>>
        %c0_i32_69 = arith.constant 0 : i32
        %c511_i32_70 = arith.constant 511 : i32
        %142 = arith.maxsi %c0_i32_69, %141 : i32
        %143 = arith.minsi %c511_i32_70, %142 : i32
        %c0_i32_71 = arith.constant 0 : i32
        %144 = tpu.memref_slice %arg4[%143, %c0_i32_71] : memref<512x128xf32, #tpu.memory_space<any>> -> memref<1x128xf32, #tpu.memory_space<any>>
        %c0_i32_72 = arith.constant 0 : i32
        %c0_i32_73 = arith.constant 0 : i32
        %145 = tpu.memref_slice %arg10[%65, %c0_i32_72, %c0_i32_73] : memref<2x16x128xf32, #tpu.memory_space<vmem>> -> memref<1x16x128xf32, #tpu.memory_space<vmem>>
        %146 = tpu.memref_squeeze %145 : memref<1x16x128xf32, #tpu.memory_space<vmem>> -> memref<16x128xf32, #tpu.memory_space<vmem>>
        %c0_i32_74 = arith.constant 0 : i32
        %147 = tpu.memref_slice %146[%137, %c0_i32_74] : memref<16x128xf32, #tpu.memory_space<vmem>> -> memref<1x128xf32, #tpu.memory_space<vmem>>
        %148 = tpu.memref_slice %arg11[%65] : memref<2x!tpu.dma_semaphore, #tpu.memory_space<semaphore_mem>> -> memref<1x!tpu.dma_semaphore, #tpu.memory_space<semaphore_mem>>
        %149 = tpu.memref_squeeze %148 : memref<1x!tpu.dma_semaphore, #tpu.memory_space<semaphore_mem>> -> memref<!tpu.dma_semaphore, #tpu.memory_space<semaphore_mem>>
        tpu.enqueue_dma source(%144 : memref<1x128xf32, #tpu.memory_space<any>>) target(%147 : memref<1x128xf32, #tpu.memory_space<vmem>>) target_semaphore(%149 : memref<!tpu.dma_semaphore, #tpu.memory_space<semaphore_mem>>)
        %c6_i32 = arith.constant 6 : i32
        %150 = arith.addi %71, %c6_i32 : i32
        %151 = arith.addi %66, %150 : i32
        %152 = arith.index_cast %arg0 : i32 to index
        %153 = arith.index_cast %151 : i32 to index
        %154 = memref.load %arg2[%152, %153] : memref<2x16xi32, #tpu.memory_space<smem>>
        %c0_i32_75 = arith.constant 0 : i32
        %c511_i32_76 = arith.constant 511 : i32
        %155 = arith.maxsi %c0_i32_75, %154 : i32
        %156 = arith.minsi %c511_i32_76, %155 : i32
        %c0_i32_77 = arith.constant 0 : i32
        %157 = tpu.memref_slice %arg4[%156, %c0_i32_77] : memref<512x128xf32, #tpu.memory_space<any>> -> memref<1x128xf32, #tpu.memory_space<any>>
        %c0_i32_78 = arith.constant 0 : i32
        %c0_i32_79 = arith.constant 0 : i32
        %158 = tpu.memref_slice %arg10[%65, %c0_i32_78, %c0_i32_79] : memref<2x16x128xf32, #tpu.memory_space<vmem>> -> memref<1x16x128xf32, #tpu.memory_space<vmem>>
        %159 = tpu.memref_squeeze %158 : memref<1x16x128xf32, #tpu.memory_space<vmem>> -> memref<16x128xf32, #tpu.memory_space<vmem>>
        %c0_i32_80 = arith.constant 0 : i32
        %160 = tpu.memref_slice %159[%150, %c0_i32_80] : memref<16x128xf32, #tpu.memory_space<vmem>> -> memref<1x128xf32, #tpu.memory_space<vmem>>
        %161 = tpu.memref_slice %arg11[%65] : memref<2x!tpu.dma_semaphore, #tpu.memory_space<semaphore_mem>> -> memref<1x!tpu.dma_semaphore, #tpu.memory_space<semaphore_mem>>
        %162 = tpu.memref_squeeze %161 : memref<1x!tpu.dma_semaphore, #tpu.memory_space<semaphore_mem>> -> memref<!tpu.dma_semaphore, #tpu.memory_space<semaphore_mem>>
        tpu.enqueue_dma source(%157 : memref<1x128xf32, #tpu.memory_space<any>>) target(%160 : memref<1x128xf32, #tpu.memory_space<vmem>>) target_semaphore(%162 : memref<!tpu.dma_semaphore, #tpu.memory_space<semaphore_mem>>)
        %c7_i32 = arith.constant 7 : i32
        %163 = arith.addi %71, %c7_i32 : i32
        %164 = arith.addi %66, %163 : i32
        %165 = arith.index_cast %arg0 : i32 to index
        %166 = arith.index_cast %164 : i32 to index
        %167 = memref.load %arg2[%165, %166] : memref<2x16xi32, #tpu.memory_space<smem>>
        %c0_i32_81 = arith.constant 0 : i32
        %c511_i32_82 = arith.constant 511 : i32
        %168 = arith.maxsi %c0_i32_81, %167 : i32
        %169 = arith.minsi %c511_i32_82, %168 : i32
        %c0_i32_83 = arith.constant 0 : i32
        %170 = tpu.memref_slice %arg4[%169, %c0_i32_83] : memref<512x128xf32, #tpu.memory_space<any>> -> memref<1x128xf32, #tpu.memory_space<any>>
        %c0_i32_84 = arith.constant 0 : i32
        %c0_i32_85 = arith.constant 0 : i32
        %171 = tpu.memref_slice %arg10[%65, %c0_i32_84, %c0_i32_85] : memref<2x16x128xf32, #tpu.memory_space<vmem>> -> memref<1x16x128xf32, #tpu.memory_space<vmem>>
        %172 = tpu.memref_squeeze %171 : memref<1x16x128xf32, #tpu.memory_space<vmem>> -> memref<16x128xf32, #tpu.memory_space<vmem>>
        %c0_i32_86 = arith.constant 0 : i32
        %173 = tpu.memref_slice %172[%163, %c0_i32_86] : memref<16x128xf32, #tpu.memory_space<vmem>> -> memref<1x128xf32, #tpu.memory_space<vmem>>
        %174 = tpu.memref_slice %arg11[%65] : memref<2x!tpu.dma_semaphore, #tpu.memory_space<semaphore_mem>> -> memref<1x!tpu.dma_semaphore, #tpu.memory_space<semaphore_mem>>
        %175 = tpu.memref_squeeze %174 : memref<1x!tpu.dma_semaphore, #tpu.memory_space<semaphore_mem>> -> memref<!tpu.dma_semaphore, #tpu.memory_space<semaphore_mem>>
        tpu.enqueue_dma source(%170 : memref<1x128xf32, #tpu.memory_space<any>>) target(%173 : memref<1x128xf32, #tpu.memory_space<vmem>>) target_semaphore(%175 : memref<!tpu.dma_semaphore, #tpu.memory_space<semaphore_mem>>)
      }
      %c2_i32_34 = arith.constant 2 : i32
    } else {
    }
    %c0 = arith.constant 0 : index
    %c0_3 = arith.constant 0 : index
    %c0_4 = arith.constant 0 : index
    %8 = vector.load %arg3[%c0, %c0_3, %c0_4] : memref<1x16x1xf32, #tpu.memory_space<vmem>>, vector<1x16x1xf32>
    %9 = vector.shape_cast %8 : vector<1x16x1xf32> to vector<16x1xf32>
    %c0_5 = arith.constant 0 : index
    %c0_6 = arith.constant 0 : index
    %10 = vector.load %arg5[%c0_5, %c0_6] : memref<2x128xf32, #tpu.memory_space<vmem>>, vector<1x128xf32>
    %c1 = arith.constant 1 : index
    %c0_7 = arith.constant 0 : index
    %11 = vector.load %arg5[%c1, %c0_7] : memref<2x128xf32, #tpu.memory_space<vmem>>, vector<1x128xf32>
    %12 = arith.subf %11, %10 : vector<1x128xf32>
    %13 = vector.broadcast %9 : vector<16x1xf32> to vector<16x128xf32>
    %14 = vector.broadcast %12 : vector<1x128xf32> to vector<16x128xf32>
    %15 = arith.mulf %13, %14 : vector<16x128xf32>
    %16 = vector.broadcast %10 : vector<1x128xf32> to vector<16x128xf32>
    %17 = arith.addf %16, %15 : vector<16x128xf32>
    %c16_i32 = arith.constant 16 : i32
    %18 = arith.muli %arg1, %c16_i32 : i32
    %19 = tpu.assume_multiple %18, 16 : i32
    %cst = arith.constant 11.3137083 : f32
    %20 = vector.broadcast %cst : f32 to vector<16x128xf32>
    %21 = arith.mulf %17, %20 : vector<16x128xf32>
    %22 = arith.index_cast %19 : i32 to index
    %c0_8 = arith.constant 0 : index
    %23 = vector.load %arg6[%22, %c0_8] : memref<16x128xf32, #tpu.memory_space<vmem>>, vector<16x128xf32>
    %24 = arith.addf %21, %23 : vector<16x128xf32>
    %c0_i32_9 = arith.constant 0 : i32
    %c0_i32_10 = arith.constant 0 : i32
    %25 = tpu.memref_slice %arg10[%0, %c0_i32_9, %c0_i32_10] : memref<2x16x128xf32, #tpu.memory_space<vmem>> -> memref<1x16x128xf32, #tpu.memory_space<vmem>>
    %26 = tpu.memref_squeeze %25 : memref<1x16x128xf32, #tpu.memory_space<vmem>> -> memref<16x128xf32, #tpu.memory_space<vmem>>
    %c0_i32_11 = arith.constant 0 : i32
    %c0_i32_12 = arith.constant 0 : i32
    %27 = tpu.memref_slice %arg10[%0, %c0_i32_11, %c0_i32_12] : memref<2x16x128xf32, #tpu.memory_space<vmem>> -> memref<1x16x128xf32, #tpu.memory_space<vmem>>
    %28 = tpu.memref_squeeze %27 : memref<1x16x128xf32, #tpu.memory_space<vmem>> -> memref<16x128xf32, #tpu.memory_space<vmem>>
    %29 = tpu.memref_slice %arg11[%0] : memref<2x!tpu.dma_semaphore, #tpu.memory_space<semaphore_mem>> -> memref<1x!tpu.dma_semaphore, #tpu.memory_space<semaphore_mem>>
    %30 = tpu.memref_squeeze %29 : memref<1x!tpu.dma_semaphore, #tpu.memory_space<semaphore_mem>> -> memref<!tpu.dma_semaphore, #tpu.memory_space<semaphore_mem>>
    tpu.wait_dma2 semaphore(%30 : memref<!tpu.dma_semaphore, #tpu.memory_space<semaphore_mem>>) src(%26 : memref<16x128xf32, #tpu.memory_space<vmem>>) dst(%28 : memref<16x128xf32, #tpu.memory_space<vmem>>)
    %31 = arith.index_cast %0 : i32 to index
    %c0_13 = arith.constant 0 : index
    %c0_14 = arith.constant 0 : index
    %32 = vector.load %arg10[%31, %c0_13, %c0_14] : memref<2x16x128xf32, #tpu.memory_space<vmem>>, vector<1x16x128xf32>
    %33 = vector.shape_cast %32 : vector<1x16x128xf32> to vector<16x128xf32>
    %cst_15 = arith.constant 11.3137083 : f32
    %34 = vector.broadcast %cst_15 : f32 to vector<16x128xf32>
    %35 = arith.mulf %33, %34 : vector<16x128xf32>
    %36 = arith.addf %35, %24 : vector<16x128xf32>
    %cst_16 = arith.constant dense<0.000000e+00> : vector<16xf32>
    %37 = vector.multi_reduction <add>, %36, %cst_16 [1] : vector<16x128xf32> to vector<16xf32>
    %38 = vector.shape_cast %37 : vector<16xf32> to vector<16x1xf32>
    %cst_17 = arith.constant 7.812500e-03 : f32
    %39 = vector.broadcast %cst_17 : f32 to vector<16x1xf32>
    %40 = arith.mulf %38, %39 : vector<16x1xf32>
    %41 = arith.mulf %36, %36 : vector<16x128xf32>
    %cst_18 = arith.constant dense<0.000000e+00> : vector<16xf32>
    %42 = vector.multi_reduction <add>, %41, %cst_18 [1] : vector<16x128xf32> to vector<16xf32>
    %43 = vector.shape_cast %42 : vector<16xf32> to vector<16x1xf32>
    %cst_19 = arith.constant 7.812500e-03 : f32
    %44 = vector.broadcast %cst_19 : f32 to vector<16x1xf32>
    %45 = arith.mulf %43, %44 : vector<16x1xf32>
    %46 = arith.mulf %40, %40 : vector<16x1xf32>
    %47 = arith.subf %45, %46 : vector<16x1xf32>
    %48 = vector.broadcast %40 : vector<16x1xf32> to vector<16x128xf32>
    %49 = arith.subf %36, %48 : vector<16x128xf32>
    %cst_20 = arith.constant 9.99999996E-13 : f32
    %50 = vector.broadcast %cst_20 : f32 to vector<16x1xf32>
    %51 = arith.addf %47, %50 : vector<16x1xf32>
    %52 = math.rsqrt %51 : vector<16x1xf32>
    %53 = vector.broadcast %52 : vector<16x1xf32> to vector<16x128xf32>
    %54 = arith.mulf %49, %53 : vector<16x128xf32>
    %c0_21 = arith.constant 0 : index
    %c0_22 = arith.constant 0 : index
    %55 = vector.load %arg7[%c0_21, %c0_22] : memref<1x128xf32, #tpu.memory_space<vmem>>, vector<1x128xf32>
    %56 = vector.broadcast %55 : vector<1x128xf32> to vector<16x128xf32>
    %57 = arith.mulf %54, %56 : vector<16x128xf32>
    %c0_23 = arith.constant 0 : index
    %c0_24 = arith.constant 0 : index
    %58 = vector.load %arg8[%c0_23, %c0_24] : memref<1x128xf32, #tpu.memory_space<vmem>>, vector<1x128xf32>
    %59 = vector.broadcast %58 : vector<1x128xf32> to vector<16x128xf32>
    %60 = arith.addf %57, %59 : vector<16x128xf32>
    %c0_25 = arith.constant 0 : index
    %c0_26 = arith.constant 0 : index
    %c0_27 = arith.constant 0 : index
    %61 = vector.load %arg9[%c0_25, %c0_26, %c0_27] : memref<1x16x128xf32, #tpu.memory_space<vmem>>, vector<1x16x128xf32>
    %62 = vector.shape_cast %61 : vector<1x16x128xf32> to vector<16x128xf32>
    %63 = vector.shape_cast %60 : vector<16x128xf32> to vector<1x16x128xf32>
    tpu.vector_store %arg9[%c0_25, %c0_26, %c0_27], %63 {strides = array<i32>} : memref<1x16x128xf32, #tpu.memory_space<vmem>>, vector<1x16x128xf32>,
    return
  }
  func.func @transform_0(%arg0: i32, %arg1: i32, %arg2: memref<2x16xi32, #tpu.memory_space<smem>>) -> (i32, i32, i32) {
    %c0_i32 = arith.constant 0 : i32
    %c0_i32_0 = arith.constant 0 : i32
    return %arg0, %arg1, %c0_i32 : i32, i32, i32
  }
  func.func @transform_2(%arg0: i32, %arg1: i32, %arg2: memref<2x16xi32, #tpu.memory_space<smem>>) -> (i32, i32) {
    %c0_i32 = arith.constant 0 : i32
    %c0_i32_0 = arith.constant 0 : i32
    %c0_i32_1 = arith.constant 0 : i32
    return %c0_i32, %c0_i32_0 : i32, i32
  }
  func.func @transform_3(%arg0: i32, %arg1: i32, %arg2: memref<2x16xi32, #tpu.memory_space<smem>>) -> (i32, i32) {
    %c0_i32 = arith.constant 0 : i32
    %c0_i32_0 = arith.constant 0 : i32
    %c0_i32_1 = arith.constant 0 : i32
    return %c0_i32, %c0_i32_0 : i32, i32
  }
  func.func @transform_4(%arg0: i32, %arg1: i32, %arg2: memref<2x16xi32, #tpu.memory_space<smem>>) -> (i32, i32) {
    %c0_i32 = arith.constant 0 : i32
    %c0_i32_0 = arith.constant 0 : i32
    %c0_i32_1 = arith.constant 0 : i32
    return %c0_i32, %c0_i32_0 : i32, i32
  }
  func.func @transform_5(%arg0: i32, %arg1: i32, %arg2: memref<2x16xi32, #tpu.memory_space<smem>>) -> (i32, i32) {
    %c0_i32 = arith.constant 0 : i32
    %c0_i32_0 = arith.constant 0 : i32
    %c0_i32_1 = arith.constant 0 : i32
    return %c0_i32, %c0_i32_0 : i32, i32
  }
  func.func @transform_6(%arg0: i32, %arg1: i32, %arg2: memref<2x16xi32, #tpu.memory_space<smem>>) -> (i32, i32, i32) {
    %c0_i32 = arith.constant 0 : i32
    %c0_i32_0 = arith.constant 0 : i32
    return %arg0, %arg1, %c0_i32 : i32, i32, i32
  }
}

</mosaic_0001>

<llo_original>
// kernel: tpu_custom_call.1
$region0: #{tpu_custom_call.1}
  #allocation0 [shape = 'u32[]', space=smem, size = 0x4, offset = 0x4, fixed_abs, tag = 'smem constant byte address 0x4 - core index']
  #allocation1 [shape = 'u32[144,128]{1,0:T(1,128)}', space=vmem, size = 0x12000, scoped, tag = 'internal scratch']
  #allocation2 [shape = 'f32[2,16,128]{2,1,0:T(8,128)}', space=vmem, size = 0x4000, scoped, tag = 'scratch operand']
  #allocation3 [shape = 's32[2]{0}', space=sflag, size = 0x8, scoped, tag = 'scratch operand']
  #allocation4 [shape = 's32[1]{0}', space=sflag, size = 0x4, scoped, tag = 'scoped memory for tpu_custom_call.1']
  #allocation5 [shape = 'u8[1024]{0}', space=smem, size = 0x400, scoped, tag = 'prefetched SMEM operand 0']
  #allocation8 [shape = 's32[]', space=sflag, size = 0x4, offset = 0, fixed_abs, tag = 'sflag constant byte address 0x0 - dummy sync flag']
  #allocation9 [shape = 's32[]', space=sflag, size = 0x4, offset = 0, fixed_abs, tag = 'sflag constant byte address 0x0 - dummy sync flag']
  #allocation10 [shape = 'u32[]', space=smem, size = 0x4, offset = 0x44, fixed_abs, tag = 'smem constant byte address 0x44 - assertion arg 0']
  #allocation11 [shape = 'u32[]', space=smem, size = 0x4, offset = 0x48, fixed_abs, tag = 'smem constant byte address 0x48 - assertion arg 1']
  #allocation12 [shape = 's32[]', space=sflag, size = 0x4, offset = 0, fixed_abs, tag = 'sflag constant byte address 0x0 - dummy sync flag']
  #allocation13 [shape = 's32[]', space=sflag, size = 0x4, offset = 0, fixed_abs, tag = 'sflag constant byte address 0x0 - dummy sync flag']
  #allocation14 [shape = 's32[]', space=sflag, size = 0x4, offset = 0, fixed_abs, tag = 'sflag constant byte address 0x0 - dummy sync flag']
  #allocation15 [shape = 's32[]', space=sflag, size = 0x4, offset = 0, fixed_abs, tag = 'sflag constant byte address 0x0 - dummy sync flag']
  #allocation16 [shape = 's32[]', space=sflag, size = 0x4, offset = 0, fixed_abs, tag = 'sflag constant byte address 0x0 - dummy sync flag']
  #allocation17 [shape = 's32[]', space=sflag, size = 0x4, offset = 0, fixed_abs, tag = 'sflag constant byte address 0x0 - dummy sync flag']
  #allocation18 [shape = 's32[]', space=sflag, size = 0x4, offset = 0, fixed_abs, tag = 'sflag constant byte address 0x0 - dummy sync flag']
  #allocation19 [shape = 's32[]', space=sflag, size = 0x4, offset = 0, fixed_abs, tag = 'sflag constant byte address 0x0 - dummy sync flag']
  #allocation20 [shape = 's32[]', space=sflag, size = 0x4, offset = 0, fixed_abs, tag = 'sflag constant byte address 0x0 - dummy sync flag']
  #allocation21 [shape = 's32[]', space=sflag, size = 0x4, offset = 0, fixed_abs, tag = 'sflag constant byte address 0x0 - dummy sync flag']
  #allocation22 [shape = 's32[]', space=sflag, size = 0x4, offset = 0, fixed_abs, tag = 'sflag constant byte address 0x0 - dummy sync flag']
  #allocation23 [shape = 's32[]', space=sflag, size = 0x4, offset = 0, fixed_abs, tag = 'sflag constant byte address 0x0 - dummy sync flag']
  #allocation24 [shape = 's32[]', space=sflag, size = 0x4, offset = 0, fixed_abs, tag = 'sflag constant byte address 0x0 - dummy sync flag']
  #allocation25 [shape = 's32[]', space=sflag, size = 0x4, offset = 0, fixed_abs, tag = 'sflag constant byte address 0x0 - dummy sync flag']
  #allocation26 [shape = 's32[]', space=sflag, size = 0x4, offset = 0, fixed_abs, tag = 'sflag constant byte address 0x0 - dummy sync flag']
  #allocation27 [shape = 's32[]', space=sflag, size = 0x4, offset = 0, fixed_abs, tag = 'sflag constant byte address 0x0 - dummy sync flag']
  #allocation28 [shape = 's32[]', space=sflag, size = 0x4, offset = 0, fixed_abs, tag = 'sflag constant byte address 0x0 - dummy sync flag']
  #allocation29 [shape = 's32[]', space=sflag, size = 0x4, offset = 0, fixed_abs, tag = 'sflag constant byte address 0x0 - dummy sync flag']
  #allocation30 [shape = 's32[]', space=sflag, size = 0x4, offset = 0, fixed_abs, tag = 'sflag constant byte address 0x0 - dummy sync flag']
  #allocation31 [shape = 's32[]', space=sflag, size = 0x4, offset = 0, fixed_abs, tag = 'sflag constant byte address 0x0 - dummy sync flag']
  #allocation32 [shape = 's32[]', space=sflag, size = 0x4, offset = 0, fixed_abs, tag = 'sflag constant byte address 0x0 - dummy sync flag']
  #allocation33 [shape = 's32[]', space=sflag, size = 0x4, offset = 0, fixed_abs, tag = 'sflag constant byte address 0x0 - dummy sync flag']
  #allocation34 [shape = 's32[]', space=sflag, size = 0x4, offset = 0, fixed_abs, tag = 'sflag constant byte address 0x0 - dummy sync flag']
  #allocation35 [shape = 's32[]', space=sflag, size = 0x4, offset = 0, fixed_abs, tag = 'sflag constant byte address 0x0 - dummy sync flag']
  #allocation36 [shape = 's32[]', space=sflag, size = 0x4, offset = 0, fixed_abs, tag = 'sflag constant byte address 0x0 - dummy sync flag']
  #allocation37 [shape = 's32[]', space=sflag, size = 0x4, offset = 0, fixed_abs, tag = 'sflag constant byte address 0x0 - dummy sync flag']
  #allocation38 [shape = 's32[]', space=sflag, size = 0x4, offset = 0, fixed_abs, tag = 'sflag constant byte address 0x0 - dummy sync flag']
  #allocation39 [shape = 's32[]', space=sflag, size = 0x4, offset = 0, fixed_abs, tag = 'sflag constant byte address 0x0 - dummy sync flag']
  #allocation40 [shape = 's32[]', space=sflag, size = 0x4, offset = 0, fixed_abs, tag = 'sflag constant byte address 0x0 - dummy sync flag']
  #allocation41 [shape = 's32[]', space=sflag, size = 0x4, offset = 0, fixed_abs, tag = 'sflag constant byte address 0x0 - dummy sync flag']
  %s0 = inlined_call_operand.vmem [shape: s32[2,16], index: 0, kind: input, shape index: {}]
  %s1 = inlined_call_operand.vmem [shape: f32[2,16,1], index: 1, kind: input, shape index: {}]
  %s2 = inlined_call_operand.hbm [shape: f32[512,128], index: 2, kind: input, shape index: {}]
  %s3 = inlined_call_operand.vmem [shape: f32[2,128], index: 3, kind: input, shape index: {}]
  %s4 = inlined_call_operand.vmem [shape: f32[16,128], index: 4, kind: input, shape index: {}]
  %s5 = inlined_call_operand.vmem [shape: f32[1,128], index: 5, kind: input, shape index: {}]
  %s6 = inlined_call_operand.vmem [shape: f32[1,128], index: 6, kind: input, shape index: {}]
  %s7 = inlined_call_operand.hbm [shape: f32[2,16,128], index: 7, kind: output, shape index: {}]
  %s8 = sld [smem:[#allocation0]]
  $region139: #{tpu_custom_call.1} parent=0
    _
  %s10 = ssub.s32 1, %s8
  %s11 = scalar_select 0, %s10, %s8
  %s12 = sshll.u32 %s0, 4
  %s13 = int_to_ptr.vmem [resolvable:$true] %s12
  %15 = dma.vmem_to_smem %s13, 32, [#allocation5], [#allocation4]
  %16 = dma.done [#allocation4], 32
  %17 = sfence
  $region1: #{tpu_custom_call.1} parent=0
    #allocation6 [shape = 'u8[16384]{0}', space=vmem, size = 0x4000, scoped, tag = 'output window, operand 0']
    #allocation7 [shape = 's32[2]{0}', space=sflag, size = 0x8, scoped, tag = 'scoped memory for tpu_custom_call.1']
    %18 = vsyncpa [#allocation7], 0
    %s19 = scalar_lea.sflag [#allocation7], 1
    %20 = vsyncpa %s19, 0
    loop: start=0, step=1, limit=4
    $region2: #{tpu_custom_call.1} parent=1 // loop_pre_header
      _
    $region3: #{tpu_custom_call.1} parent=1 // loop_header
      %s22 = sphi 0, %s26
      %p23 = scmp.ge.s32.totalorder %s22, 4
      %s29 = sphi 0, %s41
      %s30 = sphi 0, %s37
      %s31 = sphi 0, %s29
      %s32 = sphi 0, %s30
      %s33 = sphi 0, %s31
      %s34 = sphi 0, %s32
      %s46 = sphi 0, %s48
      %s49 = sphi 0, %s46
      %s50 = sphi 0, %s49
      %s66 = sphi 0, %s50
      %s70 = sphi 0, %s70
      %s72 = sphi 0, %s70
      %s73 = sphi 0, %s72
      %s87 = sphi 0, %s73
      %s91 = sphi 0, %s91
      %s93 = sphi 0, %s91
      %s94 = sphi 0, %s93
      %s108 = sphi 0, %s94
      %s112 = sphi 0, %s112
      %s114 = sphi 0, %s112
      %s115 = sphi 0, %s114
      %s129 = sphi 0, %s115
      %s133 = sphi 0, %s133
      %s135 = sphi 0, %s133
      %s136 = sphi 0, %s135
      %s150 = sphi 0, %s136
      %s158 = sphi 0, %s160
      %s161 = sphi 0, %s158
      %s162 = sphi 0, %s161
      %s178 = sphi 0, %s162
    $region4: #{tpu_custom_call.1} parent=1 // loop_header_branch
      %25 = sbr.rel (%p23) target = $region8
    $region5: #{tpu_custom_call.1} parent=1 // loop_body
      %s27 = ssub.s32 %s22, 1
      %s28 = ssub.s32 %s22, 2
      %s35 = sadd.s32 1, %s30
      %p36 = scmp.ge.s32.totalorder %s35, 1
      %s37 = scalar_select %p36, 0, %s35
      %s38 = sadd.s32 1, %s29
      %s39 = scalar_select %p36, %s38, %s29
      %p40 = scmp.ge.s32.totalorder %s39, 2
      %s41 = scalar_select %p40, 0, %s39
      %s42 = ssub.s32 %s29, %s41
      %s43 = ssub.s32 %s30, %s37
      %s44 = sor.u32 %s42, %s43
      %p45 = scmp.eq.s32.totalorder %s44, 0
      %s47 = sadd.s32 %s46, 1
      %s48 = scalar_select %p45, %s46, %s47
      %p51 = pneg %p45
      %p52 = scmp.eq.s32.totalorder %s22, 1
      %p53 = por %p51, %p52
      %p54 = scmp.ne.s32.totalorder %s46, %s49
      %p55 = scmp.eq.s32.totalorder %s22, 0
      %p56 = por %p54, %p55
      %p57 = scmp.ne.s32.totalorder %s46, %s49
      %p58 = scmp.eq.s32.totalorder %s27, 1
      %p59 = por %p57, %p58
      %p60 = scmp.ne.s32.totalorder %s49, %s50
      %p61 = scmp.eq.s32.totalorder %s27, 0
      %p62 = por %p60, %p61
      %p63 = scmp.ne.s32.totalorder %s49, %s50
      %p64 = scmp.eq.s32.totalorder %s28, 1
      %p65 = por %p63, %p64
      %p67 = scmp.ne.s32.totalorder %s50, %s66
      %p68 = scmp.eq.s32.totalorder %s28, 0
      %p69 = por %p67, %p68
      %s71 = sadd.s32 %s70, 1
      %p74 = scmp.eq.s32.totalorder %s22, 1
      %p75 = scmp.ne.s32.totalorder %s70, %s72
      %p76 = scmp.eq.s32.totalorder %s22, 0
      %p77 = por %p75, %p76
      %p78 = scmp.ne.s32.totalorder %s70, %s72
      %p79 = scmp.eq.s32.totalorder %s27, 1
      %p80 = por %p78, %p79
      %p81 = scmp.ne.s32.totalorder %s72, %s73
      %p82 = scmp.eq.s32.totalorder %s27, 0
      %p83 = por %p81, %p82
      %p84 = scmp.ne.s32.totalorder %s72, %s73
      %p85 = scmp.eq.s32.totalorder %s28, 1
      %p86 = por %p84, %p85
      %p88 = scmp.ne.s32.totalorder %s73, %s87
      %p89 = scmp.eq.s32.totalorder %s28, 0
      %p90 = por %p88, %p89
      %s92 = sadd.s32 %s91, 1
      %p95 = scmp.eq.s32.totalorder %s22, 1
      %p96 = scmp.ne.s32.totalorder %s91, %s93
      %p97 = scmp.eq.s32.totalorder %s22, 0
      %p98 = por %p96, %p97
      %p99 = scmp.ne.s32.totalorder %s91, %s93
      %p100 = scmp.eq.s32.totalorder %s27, 1
      %p101 = por %p99, %p100
      %p102 = scmp.ne.s32.totalorder %s93, %s94
      %p103 = scmp.eq.s32.totalorder %s27, 0
      %p104 = por %p102, %p103
      %p105 = scmp.ne.s32.totalorder %s93, %s94
      %p106 = scmp.eq.s32.totalorder %s28, 1
      %p107 = por %p105, %p106
      %p109 = scmp.ne.s32.totalorder %s94, %s108
      %p110 = scmp.eq.s32.totalorder %s28, 0
      %p111 = por %p109, %p110
      %s113 = sadd.s32 %s112, 1
      %p116 = scmp.eq.s32.totalorder %s22, 1
      %p117 = scmp.ne.s32.totalorder %s112, %s114
      %p118 = scmp.eq.s32.totalorder %s22, 0
      %p119 = por %p117, %p118
      %p120 = scmp.ne.s32.totalorder %s112, %s114
      %p121 = scmp.eq.s32.totalorder %s27, 1
      %p122 = por %p120, %p121
      %p123 = scmp.ne.s32.totalorder %s114, %s115
      %p124 = scmp.eq.s32.totalorder %s27, 0
      %p125 = por %p123, %p124
      %p126 = scmp.ne.s32.totalorder %s114, %s115
      %p127 = scmp.eq.s32.totalorder %s28, 1
      %p128 = por %p126, %p127
      %p130 = scmp.ne.s32.totalorder %s115, %s129
      %p131 = scmp.eq.s32.totalorder %s28, 0
      %p132 = por %p130, %p131
      %s134 = sadd.s32 %s133, 1
      %p137 = scmp.eq.s32.totalorder %s22, 1
      %p138 = scmp.ne.s32.totalorder %s133, %s135
      %p139 = scmp.eq.s32.totalorder %s22, 0
      %p140 = por %p138, %p139
      %p141 = scmp.ne.s32.totalorder %s133, %s135
      %p142 = scmp.eq.s32.totalorder %s27, 1
      %p143 = por %p141, %p142
      %p144 = scmp.ne.s32.totalorder %s135, %s136
      %p145 = scmp.eq.s32.totalorder %s27, 0
      %p146 = por %p144, %p145
      %p147 = scmp.ne.s32.totalorder %s135, %s136
      %p148 = scmp.eq.s32.totalorder %s28, 1
      %p149 = por %p147, %p148
      %p151 = scmp.ne.s32.totalorder %s136, %s150
      %p152 = scmp.eq.s32.totalorder %s28, 0
      %p153 = por %p151, %p152
      %s154 = ssub.s32 %s29, %s41
      %s155 = ssub.s32 %s30, %s37
      %s156 = sor.u32 %s154, %s155
      %p157 = scmp.eq.s32.totalorder %s156, 0
      %s159 = sadd.s32 %s158, 1
      %s160 = scalar_select %p157, %s158, %s159
      %p163 = pneg %p157
      %p164 = scmp.eq.s32.totalorder %s22, 1
      %p165 = por %p163, %p164
      %p166 = scmp.ne.s32.totalorder %s158, %s161
      %p167 = scmp.eq.s32.totalorder %s22, 0
      %p168 = por %p166, %p167
      %p169 = scmp.ne.s32.totalorder %s158, %s161
      %p170 = scmp.eq.s32.totalorder %s27, 1
      %p171 = por %p169, %p170
      %p172 = scmp.ne.s32.totalorder %s161, %s162
      %p173 = scmp.eq.s32.totalorder %s27, 0
      %p174 = por %p172, %p173
      %p175 = scmp.ne.s32.totalorder %s161, %s162
      %p176 = scmp.eq.s32.totalorder %s28, 1
      %p177 = por %p175, %p176
      %p179 = scmp.ne.s32.totalorder %s162, %s178
      %p180 = scmp.eq.s32.totalorder %s28, 0
      %p181 = por %p179, %p180
      %p182 = scmp.le.s32.totalorder 1, %s22
      %p183 = scmp.lt.s32.totalorder %s22, 3
      %p184 = pnand %p182, %p183
      %p185 = pneg %p184
      // Predicated region
      $region9: #{tpu_custom_call.1} parent=5 // pred_check
        _
      $region10: #{tpu_custom_call.1} parent=5 // pred_check_branch
        %187 = sbr.rel (%p184) target = $region12
      $region11: #{tpu_custom_call.1} parent=5 // pred_region
        %s188 = ssub.s32 %s22, 1
        // Predicated region
        $region13: #{tpu_custom_call.1} parent=11 // pred_check
          %p189 = pneg %p83
        $region14: #{tpu_custom_call.1} parent=11 // pred_check_branch
          %191 = sbr.rel (%p189) target = $region16
        $region15: #{tpu_custom_call.1} parent=11 // pred_region
          _
        $region16: #{tpu_custom_call.1} parent=11 // pred_fallthru
          _
        // Predicated region
        $region17: #{tpu_custom_call.1} parent=11 // pred_check
          %p192 = pneg %p104
        $region18: #{tpu_custom_call.1} parent=11 // pred_check_branch
          %194 = sbr.rel (%p192) target = $region20
        $region19: #{tpu_custom_call.1} parent=11 // pred_region
          _
        $region20: #{tpu_custom_call.1} parent=11 // pred_fallthru
          _
        // Predicated region
        $region21: #{tpu_custom_call.1} parent=11 // pred_check
          %p195 = pneg %p125
        $region22: #{tpu_custom_call.1} parent=11 // pred_check_branch
          %197 = sbr.rel (%p195) target = $region24
        $region23: #{tpu_custom_call.1} parent=11 // pred_region
          _
        $region24: #{tpu_custom_call.1} parent=11 // pred_fallthru
          _
        // Predicated region
        $region25: #{tpu_custom_call.1} parent=11 // pred_check
          %p198 = pneg %p146
        $region26: #{tpu_custom_call.1} parent=11 // pred_check_branch
          %200 = sbr.rel (%p198) target = $region28
        $region27: #{tpu_custom_call.1} parent=11 // pred_region
          _
        $region28: #{tpu_custom_call.1} parent=11 // pred_fallthru
          _
      $region12: #{tpu_custom_call.1} parent=5 // pred_fallthru
        _
      %p201 = scmp.lt.s32.totalorder %s22, 2
      // Predicated region
      $region29: #{tpu_custom_call.1} parent=5 // pred_check
        %p202 = pneg %p201
      $region30: #{tpu_custom_call.1} parent=5 // pred_check_branch
        %204 = sbr.rel (%p202) target = $region32
      $region31: #{tpu_custom_call.1} parent=5 // pred_region
        // Predicated region
        $region33: #{tpu_custom_call.1} parent=31 // pred_check
          %p205 = pneg %p56
        $region34: #{tpu_custom_call.1} parent=31 // pred_check_branch
          %207 = sbr.rel (%p205) target = $region36
        $region35: #{tpu_custom_call.1} parent=31 // pred_region
          %s208 = smul.u32 2, %s30
          %p209 = scmp.lt.s32.totalorder %s29, 1
          %s210 = scalar_select %p209, %s29, 1
          %p211 = scmp.lt.s32.totalorder %s208, 1
          %s212 = scalar_select %p211, %s208, 1
          %s213 = smul.addr %s210, 2
          %s214 = sadd.s32 %s212, %s213
          %s215 = smul.addr %s214, 8
          %s216 = scalar_lea.vmem %s1, %s215
          %s217 = smul.u32 2, %s30
        $region36: #{tpu_custom_call.1} parent=31 // pred_fallthru
          _
      $region32: #{tpu_custom_call.1} parent=5 // pred_fallthru
        _
      %p218 = scmp.le.s32.totalorder 1, %s22
      %p219 = scmp.lt.s32.totalorder %s22, 3
      %p220 = pnand %p218, %p219
      %p221 = pneg %p220
      // Predicated region
      $region37: #{tpu_custom_call.1} parent=5 // pred_check
        _
      $region38: #{tpu_custom_call.1} parent=5 // pred_check_branch
        %223 = sbr.rel (%p220) target = $region40
      $region39: #{tpu_custom_call.1} parent=5 // pred_region
        %s224 = ssub.s32 %s22, 1
        %s225 = smul.u32 2, %s32
        %p226 = scmp.lt.s32.totalorder %s31, 1
        %s227 = scalar_select %p226, %s31, 1
        %p228 = scmp.lt.s32.totalorder %s225, 1
        %s229 = scalar_select %p228, %s225, 1
        %s230 = smul.addr %s227, 2
        %s231 = sadd.s32 %s229, %s230
        %s232 = smul.addr %s231, 8
        %s233 = scalar_lea.vmem %s1, %s232
        %p234 = pneg %p62
        %p235 = pneg %p59
        %p236 = pneg %p83
        %p237 = pneg %p80
        %p238 = pneg %p104
        %p239 = pneg %p101
        %p240 = pneg %p125
        %p241 = pneg %p122
        %p242 = pneg %p146
        %p243 = pneg %p143
        %p244 = pneg %p174
        %p245 = pneg %p171
        %s246 = sand.u32 %s161, 1
        %s247 = scalar_lea.sflag [#allocation7], %s246
        %s248 = sand.u32 %s161, 1
        %s249 = smul.addr %s248, 16
        %s250 = scalar_lea.vmem [#allocation6], %s249
        %s251 = smul.u32 2, %s32
        %p252 = scmp.lt.s32.totalorder %s31, 1
        %s253 = scalar_select %p252, %s31, 1
        %p254 = scmp.lt.s32.totalorder %s251, 1
        %s255 = scalar_select %p254, %s251, 1
        %s256 = smul.addr %s253, 2
        %s257 = sadd.s32 %s255, %s256
        %s258 = smul.addr %s257, 8
        %s259 = scalar_lea.vmem %s1, %s258
        %s260 = smul.u32 2, %s32
        %s261 = smul.u32 2, %s32
        %p262 = scmp.lt.s32.totalorder %s32, 0
        %s263 = ssub.s32 0, %s32
        %s264 = scalar_select %p262, %s263, %s32
        %s265 = sand.u32 %s264, 1
        %s266 = ssub.s32 0, %s265
        %s267 = scalar_select %p262, %s266, %s265
        %p268 = scmp.eq.s32.totalorder %s32, 0
        // Predicated region
        $region41: #{tpu_custom_call.1} parent=39 // pred_check
          %p269 = pneg %p268
        $region42: #{tpu_custom_call.1} parent=39 // pred_check_branch
          %271 = sbr.rel (%p269) target = $region44
        $region43: #{tpu_custom_call.1} parent=39 // pred_region
          loop: start=0, step=1, limit=2
          $region45: #{tpu_custom_call.1} parent=43 // loop_pre_header
            _
          $region46: #{tpu_custom_call.1} parent=43 // loop_header
            %s273 = sphi 0, %s277
            %p274 = scmp.ge.s32.totalorder %s273, 2
          $region47: #{tpu_custom_call.1} parent=43 // loop_header_branch
            %276 = sbr.rel (%p274) target = $region51
          $region48: #{tpu_custom_call.1} parent=43 // loop_body
            %s278 = smul.u32 %s273, 8
            %s279 = sshra.s32 %s278, 7
            %s280 = sand.u32 %s278, 127
            %s281 = sadd.s32 %s279, %s31
            %s282 = smul.u32 %s281, 128
            %s283 = sshra.s32 %s278, 7
            %s284 = sand.u32 %s278, 127
            %s285 = sadd.s32 %s282, %s284
            %s286 = sld [smem:[#allocation5 + %s285]]
            %p287 = scmp.gt.s32.totalorder %s286, 0
            %s288 = scalar_select %p287, %s286, 0
            %p289 = scmp.lt.s32.totalorder %s288, 511
            %s290 = scalar_select %p289, %s288, 511
            %s291 = smul.addr %s290, 16
            %s292 = scalar_lea.hbm %s2, %s291
            %s293 = scalar_lea.vmem [#allocation2], %s278
            // Predicated region
            $region52: #{tpu_custom_call.1} parent=48 // pred_check
              _
            $region53: #{tpu_custom_call.1} parent=48 // pred_check_branch
              %295 = sbr.rel target = $region55
            $region54: #{tpu_custom_call.1} parent=48 // pred_region
              %296 = sst [smem:[#allocation10]] [#allocation9]
              %297 = sst [smem:[#allocation11]] [#allocation8]
            $region55: #{tpu_custom_call.1} parent=48 // pred_fallthru
              _
            %299 = shalt.err (0)
            %s301 = sshll.u32 %s293, 4
            %s302 = int_to_ptr.vmem [resolvable:$true] %s301
            %304 = dma.hbm_to_vmem [thread:$0]  %s292, 16, %s302, [#allocation3]
            %s305 = sadd.s32 %s278, 1
            %s306 = sshra.s32 %s305, 7
            %s307 = sand.u32 %s305, 127
            %s308 = sadd.s32 %s306, %s31
            %s309 = smul.u32 %s308, 128
            %s310 = sshra.s32 %s305, 7
            %s311 = sand.u32 %s305, 127
            %s312 = sadd.s32 %s309, %s311
            %s313 = sld [smem:[#allocation5 + %s312]]
            %p314 = scmp.gt.s32.totalorder %s313, 0
            %s315 = scalar_select %p314, %s313, 0
            %p316 = scmp.lt.s32.totalorder %s315, 511
            %s317 = scalar_select %p316, %s315, 511
            %s318 = smul.addr %s317, 16
            %s319 = scalar_lea.hbm %s2, %s318
            %s320 = scalar_lea.vmem [#allocation2], %s305
            // Predicated region
            $region56: #{tpu_custom_call.1} parent=48 // pred_check
              _
            $region57: #{tpu_custom_call.1} parent=48 // pred_check_branch
              %322 = sbr.rel target = $region59
            $region58: #{tpu_custom_call.1} parent=48 // pred_region
              %323 = sst [smem:[#allocation10]] [#allocation13]
              %324 = sst [smem:[#allocation11]] [#allocation12]
            $region59: #{tpu_custom_call.1} parent=48 // pred_fallthru
              _
            %326 = shalt.err (0)
            %s328 = sshll.u32 %s320, 4
            %s329 = int_to_ptr.vmem [resolvable:$true] %s328
            %331 = dma.hbm_to_vmem [thread:$0]  %s319, 16, %s329, [#allocation3]
            %s332 = sadd.s32 %s278, 2
            %s333 = sshra.s32 %s332, 7
            %s334 = sand.u32 %s332, 127
            %s335 = sadd.s32 %s333, %s31
            %s336 = smul.u32 %s335, 128
            %s337 = sshra.s32 %s332, 7
            %s338 = sand.u32 %s332, 127
            %s339 = sadd.s32 %s336, %s338
            %s340 = sld [smem:[#allocation5 + %s339]]
            %p341 = scmp.gt.s32.totalorder %s340, 0
            %s342 = scalar_select %p341, %s340, 0
            %p343 = scmp.lt.s32.totalorder %s342, 511
            %s344 = scalar_select %p343, %s342, 511
            %s345 = smul.addr %s344, 16
            %s346 = scalar_lea.hbm %s2, %s345
            %s347 = scalar_lea.vmem [#allocation2], %s332
            // Predicated region
            $region60: #{tpu_custom_call.1} parent=48 // pred_check
              _
            $region61: #{tpu_custom_call.1} parent=48 // pred_check_branch
              %349 = sbr.rel target = $region63
            $region62: #{tpu_custom_call.1} parent=48 // pred_region
              %350 = sst [smem:[#allocation10]] [#allocation15]
              %351 = sst [smem:[#allocation11]] [#allocation14]
            $region63: #{tpu_custom_call.1} parent=48 // pred_fallthru
              _
            %353 = shalt.err (0)
            %s355 = sshll.u32 %s347, 4
            %s356 = int_to_ptr.vmem [resolvable:$true] %s355
            %358 = dma.hbm_to_vmem [thread:$0]  %s346, 16, %s356, [#allocation3]
            %s359 = sadd.s32 %s278, 3
            %s360 = sshra.s32 %s359, 7
            %s361 = sand.u32 %s359, 127
            %s362 = sadd.s32 %s360, %s31
            %s363 = smul.u32 %s362, 128
            %s364 = sshra.s32 %s359, 7
            %s365 = sand.u32 %s359, 127
            %s366 = sadd.s32 %s363, %s365
            %s367 = sld [smem:[#allocation5 + %s366]]
            %p368 = scmp.gt.s32.totalorder %s367, 0
            %s369 = scalar_select %p368, %s367, 0
            %p370 = scmp.lt.s32.totalorder %s369, 511
            %s371 = scalar_select %p370, %s369, 511
            %s372 = smul.addr %s371, 16
            %s373 = scalar_lea.hbm %s2, %s372
            %s374 = scalar_lea.vmem [#allocation2], %s359
            // Predicated region
            $region64: #{tpu_custom_call.1} parent=48 // pred_check
              _
            $region65: #{tpu_custom_call.1} parent=48 // pred_check_branch
              %376 = sbr.rel target = $region67
            $region66: #{tpu_custom_call.1} parent=48 // pred_region
              %377 = sst [smem:[#allocation10]] [#allocation17]
              %378 = sst [smem:[#allocation11]] [#allocation16]
            $region67: #{tpu_custom_call.1} parent=48 // pred_fallthru
              _
            %380 = shalt.err (0)
            %s382 = sshll.u32 %s374, 4
            %s383 = int_to_ptr.vmem [resolvable:$true] %s382
            %385 = dma.hbm_to_vmem [thread:$0]  %s373, 16, %s383, [#allocation3]
            %s386 = sadd.s32 %s278, 4
            %s387 = sshra.s32 %s386, 7
            %s388 = sand.u32 %s386, 127
            %s389 = sadd.s32 %s387, %s31
            %s390 = smul.u32 %s389, 128
            %s391 = sshra.s32 %s386, 7
            %s392 = sand.u32 %s386, 127
            %s393 = sadd.s32 %s390, %s392
            %s394 = sld [smem:[#allocation5 + %s393]]
            %p395 = scmp.gt.s32.totalorder %s394, 0
            %s396 = scalar_select %p395, %s394, 0
            %p397 = scmp.lt.s32.totalorder %s396, 511
            %s398 = scalar_select %p397, %s396, 511
            %s399 = smul.addr %s398, 16
            %s400 = scalar_lea.hbm %s2, %s399
            %s401 = scalar_lea.vmem [#allocation2], %s386
            // Predicated region
            $region68: #{tpu_custom_call.1} parent=48 // pred_check
              _
            $region69: #{tpu_custom_call.1} parent=48 // pred_check_branch
              %403 = sbr.rel target = $region71
            $region70: #{tpu_custom_call.1} parent=48 // pred_region
              %404 = sst [smem:[#allocation10]] [#allocation19]
              %405 = sst [smem:[#allocation11]] [#allocation18]
            $region71: #{tpu_custom_call.1} parent=48 // pred_fallthru
              _
            %407 = shalt.err (0)
            %s409 = sshll.u32 %s401, 4
            %s410 = int_to_ptr.vmem [resolvable:$true] %s409
            %412 = dma.hbm_to_vmem [thread:$0]  %s400, 16, %s410, [#allocation3]
            %s413 = sadd.s32 %s278, 5
            %s414 = sshra.s32 %s413, 7
            %s415 = sand.u32 %s413, 127
            %s416 = sadd.s32 %s414, %s31
            %s417 = smul.u32 %s416, 128
            %s418 = sshra.s32 %s413, 7
            %s419 = sand.u32 %s413, 127
            %s420 = sadd.s32 %s417, %s419
            %s421 = sld [smem:[#allocation5 + %s420]]
            %p422 = scmp.gt.s32.totalorder %s421, 0
            %s423 = scalar_select %p422, %s421, 0
            %p424 = scmp.lt.s32.totalorder %s423, 511
            %s425 = scalar_select %p424, %s423, 511
            %s426 = smul.addr %s425, 16
            %s427 = scalar_lea.hbm %s2, %s426
            %s428 = scalar_lea.vmem [#allocation2], %s413
            // Predicated region
            $region72: #{tpu_custom_call.1} parent=48 // pred_check
              _
            $region73: #{tpu_custom_call.1} parent=48 // pred_check_branch
              %430 = sbr.rel target = $region75
            $region74: #{tpu_custom_call.1} parent=48 // pred_region
              %431 = sst [smem:[#allocation10]] [#allocation21]
              %432 = sst [smem:[#allocation11]] [#allocation20]
            $region75: #{tpu_custom_call.1} parent=48 // pred_fallthru
              _
            %434 = shalt.err (0)
            %s436 = sshll.u32 %s428, 4
            %s437 = int_to_ptr.vmem [resolvable:$true] %s436
            %439 = dma.hbm_to_vmem [thread:$0]  %s427, 16, %s437, [#allocation3]
            %s440 = sadd.s32 %s278, 6
            %s441 = sshra.s32 %s440, 7
            %s442 = sand.u32 %s440, 127
            %s443 = sadd.s32 %s441, %s31
            %s444 = smul.u32 %s443, 128
            %s445 = sshra.s32 %s440, 7
            %s446 = sand.u32 %s440, 127
            %s447 = sadd.s32 %s444, %s446
            %s448 = sld [smem:[#allocation5 + %s447]]
            %p449 = scmp.gt.s32.totalorder %s448, 0
            %s450 = scalar_select %p449, %s448, 0
            %p451 = scmp.lt.s32.totalorder %s450, 511
            %s452 = scalar_select %p451, %s450, 511
            %s453 = smul.addr %s452, 16
            %s454 = scalar_lea.hbm %s2, %s453
            %s455 = scalar_lea.vmem [#allocation2], %s440
            // Predicated region
            $region76: #{tpu_custom_call.1} parent=48 // pred_check
              _
            $region77: #{tpu_custom_call.1} parent=48 // pred_check_branch
              %457 = sbr.rel target = $region79
            $region78: #{tpu_custom_call.1} parent=48 // pred_region
              %458 = sst [smem:[#allocation10]] [#allocation23]
              %459 = sst [smem:[#allocation11]] [#allocation22]
            $region79: #{tpu_custom_call.1} parent=48 // pred_fallthru
              _
            %461 = shalt.err (0)
            %s463 = sshll.u32 %s455, 4
            %s464 = int_to_ptr.vmem [resolvable:$true] %s463
            %466 = dma.hbm_to_vmem [thread:$0]  %s454, 16, %s464, [#allocation3]
            %s467 = sadd.s32 %s278, 7
            %s468 = sshra.s32 %s467, 7
            %s469 = sand.u32 %s467, 127
            %s470 = sadd.s32 %s468, %s31
            %s471 = smul.u32 %s470, 128
            %s472 = sshra.s32 %s467, 7
            %s473 = sand.u32 %s467, 127
            %s474 = sadd.s32 %s471, %s473
            %s475 = sld [smem:[#allocation5 + %s474]]
            %p476 = scmp.gt.s32.totalorder %s475, 0
            %s477 = scalar_select %p476, %s475, 0
            %p478 = scmp.lt.s32.totalorder %s477, 511
            %s479 = scalar_select %p478, %s477, 511
            %s480 = smul.addr %s479, 16
            %s481 = scalar_lea.hbm %s2, %s480
            %s482 = scalar_lea.vmem [#allocation2], %s467
            // Predicated region
            $region80: #{tpu_custom_call.1} parent=48 // pred_check
              _
            $region81: #{tpu_custom_call.1} parent=48 // pred_check_branch
              %484 = sbr.rel target = $region83
            $region82: #{tpu_custom_call.1} parent=48 // pred_region
              %485 = sst [smem:[#allocation10]] [#allocation25]
              %486 = sst [smem:[#allocation11]] [#allocation24]
            $region83: #{tpu_custom_call.1} parent=48 // pred_fallthru
              _
            %488 = shalt.err (0)
            %s490 = sshll.u32 %s482, 4
            %s491 = int_to_ptr.vmem [resolvable:$true] %s490
            %493 = dma.hbm_to_vmem [thread:$0]  %s481, 16, %s491, [#allocation3]
          $region49: #{tpu_custom_call.1} parent=43 // loop_footer
            %s277 = sadd.s32 1, %s273
          $region50: #{tpu_custom_call.1} parent=43 // loop_footer_branch
            %272 = sbr.rel target = $region46
          $region51: #{tpu_custom_call.1} parent=43 // loop_exit
            _
        $region44: #{tpu_custom_call.1} parent=39 // pred_fallthru
          _
        %s494 = sadd.s32 %s32, 1
        %p495 = scmp.lt.s32.totalorder %s494, 1
        // Predicated region
        $region84: #{tpu_custom_call.1} parent=39 // pred_check
          %p496 = pneg %p495
        $region85: #{tpu_custom_call.1} parent=39 // pred_check_branch
          %498 = sbr.rel (%p496) target = $region87
        $region86: #{tpu_custom_call.1} parent=39 // pred_region
          %s499 = ssub.s32 1, %s267
          %s500 = smul.u32 %s494, 16
          loop: start=0, step=1, limit=2
          $region88: #{tpu_custom_call.1} parent=86 // loop_pre_header
            _
          $region89: #{tpu_custom_call.1} parent=86 // loop_header
            %s502 = sphi 0, %s506
            %p503 = scmp.ge.s32.totalorder %s502, 2
          $region90: #{tpu_custom_call.1} parent=86 // loop_header_branch
            %505 = sbr.rel (%p503) target = $region94
          $region91: #{tpu_custom_call.1} parent=86 // loop_body
            %s507 = smul.u32 %s502, 8
            %s508 = sadd.s32 %s500, %s507
            %s509 = sshra.s32 %s508, 7
            %s510 = sand.u32 %s508, 127
            %s511 = sadd.s32 %s509, %s31
            %s512 = smul.u32 %s511, 128
            %s513 = sshra.s32 %s508, 7
            %s514 = sand.u32 %s508, 127
            %s515 = sadd.s32 %s512, %s514
            %s516 = sld [smem:[#allocation5 + %s515]]
            %p517 = scmp.gt.s32.totalorder %s516, 0
            %s518 = scalar_select %p517, %s516, 0
            %p519 = scmp.lt.s32.totalorder %s518, 511
            %s520 = scalar_select %p519, %s518, 511
            %s521 = smul.addr %s520, 16
            %s522 = scalar_lea.hbm %s2, %s521
            %s523 = smul.u32 %s499, 16
            %s524 = scalar_lea.vmem [#allocation2], %s523
            %s525 = scalar_lea.vmem %s524, %s507 [#allocation2]
            %s526 = scalar_lea.sflag [#allocation3], %s499
            // Predicated region
            $region95: #{tpu_custom_call.1} parent=91 // pred_check
              _
            $region96: #{tpu_custom_call.1} parent=91 // pred_check_branch
              %528 = sbr.rel target = $region98
            $region97: #{tpu_custom_call.1} parent=91 // pred_region
              %529 = sst [smem:[#allocation10]] [#allocation27]
              %530 = sst [smem:[#allocation11]] [#allocation26]
            $region98: #{tpu_custom_call.1} parent=91 // pred_fallthru
              _
            %532 = shalt.err (0)
            %s534 = sshll.u32 %s525, 4
            %s535 = int_to_ptr.vmem [resolvable:$true] %s534
            %537 = dma.hbm_to_vmem [thread:$0]  %s522, 16, %s535, %s526
            %s538 = sadd.s32 %s507, 1
            %s539 = sadd.s32 %s500, %s538
            %s540 = sshra.s32 %s539, 7
            %s541 = sand.u32 %s539, 127
            %s542 = sadd.s32 %s540, %s31
            %s543 = smul.u32 %s542, 128
            %s544 = sshra.s32 %s539, 7
            %s545 = sand.u32 %s539, 127
            %s546 = sadd.s32 %s543, %s545
            %s547 = sld [smem:[#allocation5 + %s546]]
            %p548 = scmp.gt.s32.totalorder %s547, 0
            %s549 = scalar_select %p548, %s547, 0
            %p550 = scmp.lt.s32.totalorder %s549, 511
            %s551 = scalar_select %p550, %s549, 511
            %s552 = smul.addr %s551, 16
            %s553 = scalar_lea.hbm %s2, %s552
            %s554 = scalar_lea.vmem %s524, %s538 [#allocation2]
            // Predicated region
            $region99: #{tpu_custom_call.1} parent=91 // pred_check
              _
            $region100: #{tpu_custom_call.1} parent=91 // pred_check_branch
              %556 = sbr.rel target = $region102
            $region101: #{tpu_custom_call.1} parent=91 // pred_region
              %557 = sst [smem:[#allocation10]] [#allocation29]
              %558 = sst [smem:[#allocation11]] [#allocation28]
            $region102: #{tpu_custom_call.1} parent=91 // pred_fallthru
              _
            %560 = shalt.err (0)
            %s562 = sshll.u32 %s554, 4
            %s563 = int_to_ptr.vmem [resolvable:$true] %s562
            %565 = dma.hbm_to_vmem [thread:$0]  %s553, 16, %s563, %s526
            %s566 = sadd.s32 %s507, 2
            %s567 = sadd.s32 %s500, %s566
            %s568 = sshra.s32 %s567, 7
            %s569 = sand.u32 %s567, 127
            %s570 = sadd.s32 %s568, %s31
            %s571 = smul.u32 %s570, 128
            %s572 = sshra.s32 %s567, 7
            %s573 = sand.u32 %s567, 127
            %s574 = sadd.s32 %s571, %s573
            %s575 = sld [smem:[#allocation5 + %s574]]
            %p576 = scmp.gt.s32.totalorder %s575, 0
            %s577 = scalar_select %p576, %s575, 0
            %p578 = scmp.lt.s32.totalorder %s577, 511
            %s579 = scalar_select %p578, %s577, 511
            %s580 = smul.addr %s579, 16
            %s581 = scalar_lea.hbm %s2, %s580
            %s582 = scalar_lea.vmem %s524, %s566 [#allocation2]
            // Predicated region
            $region103: #{tpu_custom_call.1} parent=91 // pred_check
              _
            $region104: #{tpu_custom_call.1} parent=91 // pred_check_branch
              %584 = sbr.rel target = $region106
            $region105: #{tpu_custom_call.1} parent=91 // pred_region
              %585 = sst [smem:[#allocation10]] [#allocation31]
              %586 = sst [smem:[#allocation11]] [#allocation30]
            $region106: #{tpu_custom_call.1} parent=91 // pred_fallthru
              _
            %588 = shalt.err (0)
            %s590 = sshll.u32 %s582, 4
            %s591 = int_to_ptr.vmem [resolvable:$true] %s590
            %593 = dma.hbm_to_vmem [thread:$0]  %s581, 16, %s591, %s526
            %s594 = sadd.s32 %s507, 3
            %s595 = sadd.s32 %s500, %s594
            %s596 = sshra.s32 %s595, 7
            %s597 = sand.u32 %s595, 127
            %s598 = sadd.s32 %s596, %s31
            %s599 = smul.u32 %s598, 128
            %s600 = sshra.s32 %s595, 7
            %s601 = sand.u32 %s595, 127
            %s602 = sadd.s32 %s599, %s601
            %s603 = sld [smem:[#allocation5 + %s602]]
            %p604 = scmp.gt.s32.totalorder %s603, 0
            %s605 = scalar_select %p604, %s603, 0
            %p606 = scmp.lt.s32.totalorder %s605, 511
            %s607 = scalar_select %p606, %s605, 511
            %s608 = smul.addr %s607, 16
            %s609 = scalar_lea.hbm %s2, %s608
            %s610 = scalar_lea.vmem %s524, %s594 [#allocation2]
            // Predicated region
            $region107: #{tpu_custom_call.1} parent=91 // pred_check
              _
            $region108: #{tpu_custom_call.1} parent=91 // pred_check_branch
              %612 = sbr.rel target = $region110
            $region109: #{tpu_custom_call.1} parent=91 // pred_region
              %613 = sst [smem:[#allocation10]] [#allocation33]
              %614 = sst [smem:[#allocation11]] [#allocation32]
            $region110: #{tpu_custom_call.1} parent=91 // pred_fallthru
              _
            %616 = shalt.err (0)
            %s618 = sshll.u32 %s610, 4
            %s619 = int_to_ptr.vmem [resolvable:$true] %s618
            %621 = dma.hbm_to_vmem [thread:$0]  %s609, 16, %s619, %s526
            %s622 = sadd.s32 %s507, 4
            %s623 = sadd.s32 %s500, %s622
            %s624 = sshra.s32 %s623, 7
            %s625 = sand.u32 %s623, 127
            %s626 = sadd.s32 %s624, %s31
            %s627 = smul.u32 %s626, 128
            %s628 = sshra.s32 %s623, 7
            %s629 = sand.u32 %s623, 127
            %s630 = sadd.s32 %s627, %s629
            %s631 = sld [smem:[#allocation5 + %s630]]
            %p632 = scmp.gt.s32.totalorder %s631, 0
            %s633 = scalar_select %p632, %s631, 0
            %p634 = scmp.lt.s32.totalorder %s633, 511
            %s635 = scalar_select %p634, %s633, 511
            %s636 = smul.addr %s635, 16
            %s637 = scalar_lea.hbm %s2, %s636
            %s638 = scalar_lea.vmem %s524, %s622 [#allocation2]
            // Predicated region
            $region111: #{tpu_custom_call.1} parent=91 // pred_check
              _
            $region112: #{tpu_custom_call.1} parent=91 // pred_check_branch
              %640 = sbr.rel target = $region114
            $region113: #{tpu_custom_call.1} parent=91 // pred_region
              %641 = sst [smem:[#allocation10]] [#allocation35]
              %642 = sst [smem:[#allocation11]] [#allocation34]
            $region114: #{tpu_custom_call.1} parent=91 // pred_fallthru
              _
            %644 = shalt.err (0)
            %s646 = sshll.u32 %s638, 4
            %s647 = int_to_ptr.vmem [resolvable:$true] %s646
            %649 = dma.hbm_to_vmem [thread:$0]  %s637, 16, %s647, %s526
            %s650 = sadd.s32 %s507, 5
            %s651 = sadd.s32 %s500, %s650
            %s652 = sshra.s32 %s651, 7
            %s653 = sand.u32 %s651, 127
            %s654 = sadd.s32 %s652, %s31
            %s655 = smul.u32 %s654, 128
            %s656 = sshra.s32 %s651, 7
            %s657 = sand.u32 %s651, 127
            %s658 = sadd.s32 %s655, %s657
            %s659 = sld [smem:[#allocation5 + %s658]]
            %p660 = scmp.gt.s32.totalorder %s659, 0
            %s661 = scalar_select %p660, %s659, 0
            %p662 = scmp.lt.s32.totalorder %s661, 511
            %s663 = scalar_select %p662, %s661, 511
            %s664 = smul.addr %s663, 16
            %s665 = scalar_lea.hbm %s2, %s664
            %s666 = scalar_lea.vmem %s524, %s650 [#allocation2]
            // Predicated region
            $region115: #{tpu_custom_call.1} parent=91 // pred_check
              _
            $region116: #{tpu_custom_call.1} parent=91 // pred_check_branch
              %668 = sbr.rel target = $region118
            $region117: #{tpu_custom_call.1} parent=91 // pred_region
              %669 = sst [smem:[#allocation10]] [#allocation37]
              %670 = sst [smem:[#allocation11]] [#allocation36]
            $region118: #{tpu_custom_call.1} parent=91 // pred_fallthru
              _
            %672 = shalt.err (0)
            %s674 = sshll.u32 %s666, 4
            %s675 = int_to_ptr.vmem [resolvable:$true] %s674
            %677 = dma.hbm_to_vmem [thread:$0]  %s665, 16, %s675, %s526
            %s678 = sadd.s32 %s507, 6
            %s679 = sadd.s32 %s500, %s678
            %s680 = sshra.s32 %s679, 7
            %s681 = sand.u32 %s679, 127
            %s682 = sadd.s32 %s680, %s31
            %s683 = smul.u32 %s682, 128
            %s684 = sshra.s32 %s679, 7
            %s685 = sand.u32 %s679, 127
            %s686 = sadd.s32 %s683, %s685
            %s687 = sld [smem:[#allocation5 + %s686]]
            %p688 = scmp.gt.s32.totalorder %s687, 0
            %s689 = scalar_select %p688, %s687, 0
            %p690 = scmp.lt.s32.totalorder %s689, 511
            %s691 = scalar_select %p690, %s689, 511
            %s692 = smul.addr %s691, 16
            %s693 = scalar_lea.hbm %s2, %s692
            %s694 = scalar_lea.vmem %s524, %s678 [#allocation2]
            // Predicated region
            $region119: #{tpu_custom_call.1} parent=91 // pred_check
              _
            $region120: #{tpu_custom_call.1} parent=91 // pred_check_branch
              %696 = sbr.rel target = $region122
            $region121: #{tpu_custom_call.1} parent=91 // pred_region
              %697 = sst [smem:[#allocation10]] [#allocation39]
              %698 = sst [smem:[#allocation11]] [#allocation38]
            $region122: #{tpu_custom_call.1} parent=91 // pred_fallthru
              _
            %700 = shalt.err (0)
            %s702 = sshll.u32 %s694, 4
            %s703 = int_to_ptr.vmem [resolvable:$true] %s702
            %705 = dma.hbm_to_vmem [thread:$0]  %s693, 16, %s703, %s526
            %s706 = sadd.s32 %s507, 7
            %s707 = sadd.s32 %s500, %s706
            %s708 = sshra.s32 %s707, 7
            %s709 = sand.u32 %s707, 127
            %s710 = sadd.s32 %s708, %s31
            %s711 = smul.u32 %s710, 128
            %s712 = sshra.s32 %s707, 7
            %s713 = sand.u32 %s707, 127
            %s714 = sadd.s32 %s711, %s713
            %s715 = sld [smem:[#allocation5 + %s714]]
            %p716 = scmp.gt.s32.totalorder %s715, 0
            %s717 = scalar_select %p716, %s715, 0
            %p718 = scmp.lt.s32.totalorder %s717, 511
            %s719 = scalar_select %p718, %s717, 511
            %s720 = smul.addr %s719, 16
            %s721 = scalar_lea.hbm %s2, %s720
            %s722 = scalar_lea.vmem %s524, %s706 [#allocation2]
            // Predicated region
            $region123: #{tpu_custom_call.1} parent=91 // pred_check
              _
            $region124: #{tpu_custom_call.1} parent=91 // pred_check_branch
              %724 = sbr.rel target = $region126
            $region125: #{tpu_custom_call.1} parent=91 // pred_region
              %725 = sst [smem:[#allocation10]] [#allocation41]
              %726 = sst [smem:[#allocation11]] [#allocation40]
            $region126: #{tpu_custom_call.1} parent=91 // pred_fallthru
              _
            %728 = shalt.err (0)
            %s730 = sshll.u32 %s722, 4
            %s731 = int_to_ptr.vmem [resolvable:$true] %s730
            %733 = dma.hbm_to_vmem [thread:$0]  %s721, 16, %s731, %s526
          $region92: #{tpu_custom_call.1} parent=86 // loop_footer
            %s506 = sadd.s32 1, %s502
          $region93: #{tpu_custom_call.1} parent=86 // loop_footer_branch
            %501 = sbr.rel target = $region89
          $region94: #{tpu_custom_call.1} parent=86 // loop_exit
            _
        $region87: #{tpu_custom_call.1} parent=39 // pred_fallthru
          _
        %v734 = vld [vmem:[%s259] sm:$0xff]
        %v735 = vld [vmem:[%s259 + $0x8] sm:$0xff]
        %v736 = vld [vmem:[%s3] sm:$0x1]
        %v737 = vld [vmem:[%s3 + $0x1] sm:$0x1]
        %v738 = vsub.f32 %v737, %v736
        %740 = vset.pattern.permute.xlu0 0
        %741 = vperm.xlu0 %740, %v734
        %v742 = vpop.permute.xlu0 %741
        %745 = vset.pattern.permute.xlu0 0
        %746 = vperm.xlu0 %745, %v735
        %v747 = vpop.permute.xlu0 %746
        %v749 = vlaneseq
        %v750 = vshrl.u32 %v749, 7
        %v751 = vsub.s32 0, %v750
        %v752 = vrot.slane %v738, %v751
        %v753 = vmul.f32 %v742, %v752
        %v754 = vmul.f32 %v747, %v752
        %v755 = vlaneseq
        %v756 = vshrl.u32 %v755, 7
        %v757 = vsub.s32 0, %v756
        %v758 = vrot.slane %v736, %v757
        %v759 = vadd.f32 %v758, %v753
        %v760 = vadd.f32 %v758, %v754
        %s761 = smul.u32 %s32, 16
        %v762 = vmul.f32 %v759, 11.313708
        %v763 = vmul.f32 %v760, 11.313708
        %s764 = scalar_lea.vmem %s4, %s761
        %v765 = vld [vmem:[%s764] sm:$0xff]
        %v766 = vld [vmem:[%s764 + $0x8] sm:$0xff]
        %v767 = vadd.f32 %v762, %v765
        %v768 = vadd.f32 %v763, %v766
        %s769 = smul.u32 %s267, 16
        %s770 = scalar_lea.vmem [#allocation2], %s769
        %s771 = scalar_lea.sflag [#allocation3], %s267
        %s772 = smul.u32 16, 1
        %s773 = sshll.u32 %s772, 4
        %774 = dma.done %s771, %s773
        %v775 = vld [vmem:[%s770] sm:$0xff]
        %v776 = vld [vmem:[%s770 + $0x8] sm:$0xff]
        %v777 = vmul.f32 %v775, 11.313708
        %v778 = vmul.f32 %v776, 11.313708
        %v779 = vadd.f32 %v777, %v767
        %v780 = vadd.f32 %v778, %v768
        %781 = vadd.xlane.f32.xlu0 %v779
        %v782 = vpop.xlane.xlu0 %781
        %783 = vadd.xlane.f32.xlu0 %v780
        %v784 = vpop.xlane.xlu0 %783
        %v785 = vmul.f32 %v782, 0.0078125
        %v786 = vmul.f32 %v784, 0.0078125
        %v787 = vmul.f32 %v779, %v779
        %v788 = vmul.f32 %v780, %v780
        %789 = vadd.xlane.f32.xlu0 %v787
        %v790 = vpop.xlane.xlu0 %789
        %791 = vadd.xlane.f32.xlu0 %v788
        %v792 = vpop.xlane.xlu0 %791
        %v793 = vmul.f32 %v790, 0.0078125
        %v794 = vmul.f32 %v792, 0.0078125
        %v795 = vmul.f32 %v785, %v785
        %v796 = vmul.f32 %v786, %v786
        %v797 = vsub.f32 %v793, %v795
        %v798 = vsub.f32 %v794, %v796
        %v799 = vsub.f32 %v779, %v785
        %v800 = vsub.f32 %v780, %v786
        %v801 = vadd.f32 %v797, 1e-12
        %v802 = vadd.f32 %v798, 1e-12
        %v803 = vrsqrt.pop %v801
        %v804 = vrsqrt.pop %v802
        %v805 = vmul.f32 %v799, %v803
        %v806 = vmul.f32 %v800, %v804
        %v807 = vld [vmem:[%s5] sm:$0x1]
        %v809 = vlaneseq
        %v810 = vshrl.u32 %v809, 7
        %v811 = vsub.s32 0, %v810
        %v812 = vrot.slane %v807, %v811
        %v814 = vmul.f32 %v805, %v812
        %v815 = vmul.f32 %v806, %v812
        %v816 = vld [vmem:[%s6] sm:$0x1]
        %v818 = vlaneseq
        %v819 = vshrl.u32 %v818, 7
        %v820 = vsub.s32 0, %v819
        %v821 = vrot.slane %v816, %v820
        %v823 = vadd.f32 %v814, %v821
        %v824 = vadd.f32 %v815, %v821
        %825 = vst [vmem:[%s250] sm:$0xff] %v823
        %826 = vst [vmem:[%s250 + $0x8] sm:$0xff] %v824
        %s827 = sand.u32 %s161, 1
        %s828 = scalar_lea.sflag [#allocation7], %s827
        %s829 = sand.u32 %s161, 1
        %s830 = smul.addr %s829, 16
        %s831 = scalar_lea.vmem [#allocation6], %s830
        // Predicated region
        $region127: #{tpu_custom_call.1} parent=39 // pred_check
          %p832 = pneg %p171
        $region128: #{tpu_custom_call.1} parent=39 // pred_check_branch
          %834 = sbr.rel (%p832) target = $region130
        $region129: #{tpu_custom_call.1} parent=39 // pred_region
          %s835 = smul.u32 2, %s32
          %s837 = ssub.s32 256, 256
          %838 = vsyncadd %s828, %s837
          %s839 = smul.addr %s31, 2
          %s840 = sadd.s32 %s835, %s839
          %s841 = smul.addr %s840, 128
          %s842 = scalar_lea.hbm %s7, %s841
          %s843 = sshll.u32 %s831, 4
          %s844 = int_to_ptr.vmem [resolvable:$true] %s843
          %849 = dma.vmem_to_hbm [thread:$0]  %s844, 256, %s842, %s828, 128, 128, 8
        $region130: #{tpu_custom_call.1} parent=39 // pred_fallthru
          _
      $region40: #{tpu_custom_call.1} parent=5 // pred_fallthru
        _
      %p850 = scmp.le.s32.totalorder 2, %s22
      // Predicated region
      $region131: #{tpu_custom_call.1} parent=5 // pred_check
        %p851 = pneg %p850
      $region132: #{tpu_custom_call.1} parent=5 // pred_check_branch
        %853 = sbr.rel (%p851) target = $region134
      $region133: #{tpu_custom_call.1} parent=5 // pred_region
        %s854 = ssub.s32 %s22, 2
        // Predicated region
        $region135: #{tpu_custom_call.1} parent=133 // pred_check
          %p855 = pneg %p177
        $region136: #{tpu_custom_call.1} parent=133 // pred_check_branch
          %857 = sbr.rel (%p855) target = $region138
        $region137: #{tpu_custom_call.1} parent=133 // pred_region
          %s858 = sand.u32 %s162, 1
          %s859 = scalar_lea.sflag [#allocation7], %s858
          %s860 = sand.u32 %s162, 1
          %s861 = smul.addr %s860, 16
          %s862 = scalar_lea.vmem [#allocation6], %s861
          %863 = dma.done %s859, 256
        $region138: #{tpu_custom_call.1} parent=133 // pred_fallthru
          _
      $region134: #{tpu_custom_call.1} parent=5 // pred_fallthru
        _
    $region6: #{tpu_custom_call.1} parent=1 // loop_footer
      %s26 = sadd.s32 1, %s22
    $region7: #{tpu_custom_call.1} parent=1 // loop_footer_branch
      %21 = sbr.rel target = $region3
    $region8: #{tpu_custom_call.1} parent=1 // loop_exit
      _
    %864 = vsyncpa [#allocation7], 1
    %s865 = scalar_lea.sflag [#allocation7], 1
    %866 = vsyncpa %s865, 1
  %867 = vsyncmov [#allocation3]
  %s868 = vpop.sfrf %867
  %p869 = scmp.eq.s32.totalorder %s868, 0
  %p870 = pneg %p869
  %872 = shalt.err (%p870)
  %s873 = scalar_lea.sflag [#allocation3], 1
  %874 = vsyncmov %s873
  %s875 = vpop.sfrf %874
  %p876 = scmp.eq.s32.totalorder %s875, 0
  %p877 = pneg %p876
  %879 = shalt.err (%p877)

</llo_original>
